<compile_context>
chip_gen: v5e
topology: v5e:2x2
jax: 0.10.0
libtpu: 0.0.40
codegen_flags: <defaults>
</compile_context>

<pallas_src>
import jax
import jax.numpy as jnp
from jax.experimental import pallas as pl
from jax.experimental.pallas import tpu as pltpu

N = 128                 # number of graph nodes (vertices)
IN_FEATURES = 16        # raw per-vertex features
ENCODER_FEATURES = 128  # input-encoder width
HIDDEN = 128            # hidden_channels (same for all 4 conv layers)
NUM_CONV_LAYERS = 4


def gnn_kernel(x_ref, a_ref, wenc_ref, benc_ref, wcat_hbm, bl_ref, o_ref,
               z_ref, wcat_vmem, wcat_sem):
    # Kick off the 512 KiB fused-weight DMA immediately so it overlaps the
    # encoder matmul + adjacency-normalization prologue.
    wcat_cp = pltpu.make_async_copy(wcat_hbm, wcat_vmem, wcat_sem)
    wcat_cp.start()

    a = a_ref[...]                                                  # (N, N) 0/1

    # Mean-aggregation normalizer, hoisted out of the layer loop: pre-scale
    # each adjacency row by 1/deg (0-degree rows -> all-zero rows). Exact.
    deg = jnp.sum(a, axis=-1, keepdims=True)                        # (N, 1)
    inv_deg = jnp.where(deg > 0.0, 1.0 / jnp.maximum(deg, 1.0), 0.0)
    a_norm = a * inv_deg                                            # (N, N)

    # Input encoder: Linear(IN_FEATURES -> ENCODER_FEATURES) (+ Identity).
    # K=16 contraction kept unpadded (legal layout; padding only wastes MXU).
    h0 = (jnp.dot(x_ref[...], wenc_ref[...], preferred_element_type=jnp.float32)
          + benc_ref[...])                                          # (N, ENC)
    z_ref[:, pl.ds(HIDDEN, HIDDEN)] = h0    # h lives permanently in z[:, H:]

    wcat_cp.wait()    # fused weights resident before the layer loop needs them

    # 4 x (SAGEConv + ReLU); static unroll, fused lin_l/lin_r matmul (K=256)
    # fed straight from the persistent (N, 2H) scratch — no concat, no copy.
    for i in range(NUM_CONV_LAYERS):
        h = z_ref[:, pl.ds(HIDDEN, HIDDEN)]                         # (N, H)
        # mean of neighbors -> left half of the scratch
        z_ref[:, pl.ds(0, HIDDEN)] = jnp.dot(
            a_norm, h, preferred_element_type=jnp.float32)
        # lin_l(agg) + lin_r(h) + b as a single K=2H matmul over the scratch
        hn = (jnp.dot(z_ref[...], wcat_vmem[i],
                      preferred_element_type=jnp.float32)
              + bl_ref[i])                                          # (N, H)
        # ReLU activation; F.dropout with p=0 is the identity.
        # TODO(synk): dropout with p > 0 (training mode) not implemented.
        z_ref[:, pl.ds(HIDDEN, HIDDEN)] = jnp.maximum(hn, 0.0)

    o_ref[...] = z_ref[:, pl.ds(HIDDEN, HIDDEN)]


def prepare_params(wenc, benc, wl, bl, wr):
    """One-time parameter preprocessing (hoisted out of the per-call path).

    Fuses lin_l / lin_r into a single (L, 2*HIDDEN, HIDDEN) weight: the first
    HIDDEN rows multiply the aggregated neighbors, the last HIDDEN rows
    multiply the node's own features.
    """
    wcat = jnp.concatenate([wl, wr], axis=1)          # (L, 2*HIDDEN, HIDDEN)
    return {"wenc": wenc, "benc": benc, "wcat": wcat, "bl": bl}


def gnn_forward(x, a, params):
    wenc, benc, wcat, bl = (params["wenc"], params["benc"],
                            params["wcat"], params["bl"])

    flops = 2 * (N * IN_FEATURES * ENCODER_FEATURES
                 + NUM_CONV_LAYERS * (N * N * HIDDEN + N * 2 * HIDDEN * HIDDEN))
    bytes_accessed = 4 * (x.size + a.size + wenc.size + benc.size
                          + wcat.size + bl.size + N * HIDDEN)

    vmem = pl.BlockSpec(memory_space=pltpu.MemorySpace.VMEM)
    return pl.pallas_call(
        gnn_kernel,
        out_shape=jax.ShapeDtypeStruct((N, HIDDEN), jnp.float32),
        in_specs=[vmem,                               # x
                  vmem,                               # a
                  vmem,                               # wenc
                  vmem,                               # benc
                  pl.BlockSpec(memory_space=pl.ANY),  # wcat (manual DMA)
                  vmem],                              # bl
        out_specs=vmem,
        scratch_shapes=[
            pltpu.VMEM((N, 2 * HIDDEN), jnp.float32),                     # z
            pltpu.VMEM((NUM_CONV_LAYERS, 2 * HIDDEN, HIDDEN), jnp.float32),
            pltpu.SemaphoreType.DMA(()),
        ],
        cost_estimate=pl.CostEstimate(flops=flops,
                                      bytes_accessed=bytes_accessed,
                                      transcendentals=0),
    )(x, a, wenc, benc, wcat, bl)


def gnn_reference(x, a, wenc, benc, wl, bl, wr):
    deg = jnp.sum(a, axis=-1, keepdims=True)
    inv_deg = jnp.where(deg > 0.0, 1.0 / jnp.maximum(deg, 1.0), 0.0)
    h = x @ wenc + benc
    for i in range(NUM_CONV_LAYERS):
        agg = (a @ h) * inv_deg
        h = agg @ wl[i] + bl[i] + h @ wr[i]
        h = jnp.maximum(h, 0.0)
    return h


if __name__ == "__main__":
    key = jax.random.PRNGKey(0)
    ks = jax.random.split(key, 8)

    # Deterministic synthetic inputs / parameters.
    x = jax.random.normal(ks[0], (N, IN_FEATURES), dtype=jnp.float32)
    a = (jax.random.uniform(ks[1], (N, N)) < 0.1).astype(jnp.float32)

    wenc = jax.random.normal(ks[2], (IN_FEATURES, ENCODER_FEATURES), jnp.float32) * 0.1
    benc = jax.random.normal(ks[3], (1, ENCODER_FEATURES), jnp.float32) * 0.1
    wl = jax.random.normal(ks[4], (NUM_CONV_LAYERS, HIDDEN, HIDDEN), jnp.float32) * 0.05
    bl = jax.random.normal(ks[5], (NUM_CONV_LAYERS, 1, HIDDEN), jnp.float32) * 0.05
    wr = jax.random.normal(ks[6], (NUM_CONV_LAYERS, HIDDEN, HIDDEN), jnp.float32) * 0.05

    # One-time parameter prep (outside the hot path).
    params = prepare_params(wenc, benc, wl, bl, wr)

    out = gnn_forward(x, a, params)
    out = jax.block_until_ready(out)

    ref = gnn_reference(x, a, wenc, benc, wl, bl, wr)
    assert out.shape == (N, HIDDEN)
    assert jnp.allclose(out, ref, atol=1e-3, rtol=1e-3), "mismatch vs reference"

    print("KERNEL_OK")
</pallas_src>

<mosaic_0001>
module attributes {stable_mosaic.version = 11 : i64} {
  func.func @gnn_kernel(%arg0: memref<128x16xf32, #tpu.memory_space<vmem>>, %arg1: memref<128x128xf32, #tpu.memory_space<vmem>>, %arg2: memref<16x128xf32, #tpu.memory_space<vmem>>, %arg3: memref<1x128xf32, #tpu.memory_space<vmem>>, %arg4: memref<4x256x128xf32, #tpu.memory_space<any>>, %arg5: memref<4x1x128xf32, #tpu.memory_space<vmem>>, %arg6: memref<128x128xf32, #tpu.memory_space<vmem>>, %arg7: memref<128x256xf32, #tpu.memory_space<vmem>>, %arg8: memref<4x256x128xf32, #tpu.memory_space<vmem>>, %arg9: memref<!tpu.dma_semaphore, #tpu.memory_space<semaphore_mem>>) attributes {dimension_semantics = [], scalar_prefetch = 0 : i64, scratch_operands = 3 : i64, tpu.core_type = #tpu.core_type<tc>} {
    tpu.enqueue_dma source(%arg4 : memref<4x256x128xf32, #tpu.memory_space<any>>) target(%arg8 : memref<4x256x128xf32, #tpu.memory_space<vmem>>) target_semaphore(%arg9 : memref<!tpu.dma_semaphore, #tpu.memory_space<semaphore_mem>>)
    %c0 = arith.constant 0 : index
    %c0_0 = arith.constant 0 : index
    %0 = vector.load %arg1[%c0, %c0_0] : memref<128x128xf32, #tpu.memory_space<vmem>>, vector<128x128xf32>
    %cst = arith.constant dense<0.000000e+00> : vector<128xf32>
    %1 = vector.multi_reduction <add>, %0, %cst [1] : vector<128x128xf32> to vector<128xf32>
    %2 = vector.shape_cast %1 : vector<128xf32> to vector<128x1xf32>
    %cst_1 = arith.constant 0.000000e+00 : f32
    %3 = vector.broadcast %cst_1 : f32 to vector<128x1xf32>
    %4 = arith.cmpf ogt, %2, %3 : vector<128x1xf32>
    %cst_2 = arith.constant 1.000000e+00 : f32
    %5 = vector.broadcast %cst_2 : f32 to vector<128x1xf32>
    %6 = arith.maximumf %2, %5 : vector<128x1xf32>
    %cst_3 = arith.constant 1.000000e+00 : f32
    %7 = vector.broadcast %cst_3 : f32 to vector<128x1xf32>
    %8 = arith.divf %7, %6 : vector<128x1xf32>
    %cst_4 = arith.constant 0.000000e+00 : f32
    %9 = vector.broadcast %cst_4 : f32 to vector<128x1xf32>
    %10 = arith.select %4, %8, %9 : vector<128x1xi1>, vector<128x1xf32>
    %11 = vector.broadcast %10 : vector<128x1xf32> to vector<128x128xf32>
    %12 = arith.mulf %0, %11 : vector<128x128xf32>
    %c0_5 = arith.constant 0 : index
    %c0_6 = arith.constant 0 : index
    %13 = vector.load %arg0[%c0_5, %c0_6] : memref<128x16xf32, #tpu.memory_space<vmem>>, vector<128x16xf32>
    %c0_7 = arith.constant 0 : index
    %c0_8 = arith.constant 0 : index
    %14 = vector.load %arg2[%c0_7, %c0_8] : memref<16x128xf32, #tpu.memory_space<vmem>>, vector<16x128xf32>
    %cst_9 = arith.constant dense<0.000000e+00> : vector<128x128xf32>
    %15 = tpu.matmul %13, %14, %cst_9 {dimension_numbers = #tpu.dot_dimension_numbers<[1], [0], [0], [1], [0, 0, 1, 1], [], []>} : vector<128x16xf32>, vector<16x128xf32>, vector<128x128xf32> -> vector<128x128xf32>
    %c0_10 = arith.constant 0 : index
    %c0_11 = arith.constant 0 : index
    %16 = vector.load %arg3[%c0_10, %c0_11] : memref<1x128xf32, #tpu.memory_space<vmem>>, vector<1x128xf32>
    %17 = vector.broadcast %16 : vector<1x128xf32> to vector<128x128xf32>
    %18 = arith.addf %15, %17 : vector<128x128xf32>
    %c0_12 = arith.constant 0 : index
    %c128 = arith.constant 128 : index
    %19 = vector.load %arg7[%c0_12, %c128] : memref<128x256xf32, #tpu.memory_space<vmem>>, vector<128x128xf32>
    tpu.vector_store %arg7[%c0_12, %c128], %18 {strides = array<i32>} : memref<128x256xf32, #tpu.memory_space<vmem>>, vector<128x128xf32>,
    tpu.wait_dma2 semaphore(%arg9 : memref<!tpu.dma_semaphore, #tpu.memory_space<semaphore_mem>>) src(%arg4 : memref<4x256x128xf32, #tpu.memory_space<any>>) dst(%arg8 : memref<4x256x128xf32, #tpu.memory_space<vmem>>)
    %c0_13 = arith.constant 0 : index
    %c128_14 = arith.constant 128 : index
    %20 = vector.load %arg7[%c0_13, %c128_14] : memref<128x256xf32, #tpu.memory_space<vmem>>, vector<128x128xf32>
    %cst_15 = arith.constant dense<0.000000e+00> : vector<128x128xf32>
    %21 = tpu.matmul %12, %20, %cst_15 {dimension_numbers = #tpu.dot_dimension_numbers<[1], [0], [0], [1], [0, 0, 1, 1], [], []>} : vector<128x128xf32>, vector<128x128xf32>, vector<128x128xf32> -> vector<128x128xf32>
    %c0_16 = arith.constant 0 : index
    %c0_17 = arith.constant 0 : index
    %22 = vector.load %arg7[%c0_16, %c0_17] : memref<128x256xf32, #tpu.memory_space<vmem>>, vector<128x128xf32>
    tpu.vector_store %arg7[%c0_16, %c0_17], %21 {strides = array<i32>} : memref<128x256xf32, #tpu.memory_space<vmem>>, vector<128x128xf32>,
    %c0_18 = arith.constant 0 : index
    %c0_19 = arith.constant 0 : index
    %23 = vector.load %arg7[%c0_18, %c0_19] : memref<128x256xf32, #tpu.memory_space<vmem>>, vector<128x256xf32>
    %c0_20 = arith.constant 0 : index
    %c0_21 = arith.constant 0 : index
    %c0_22 = arith.constant 0 : index
    %24 = vector.load %arg8[%c0_20, %c0_21, %c0_22] : memref<4x256x128xf32, #tpu.memory_space<vmem>>, vector<1x256x128xf32>
    %25 = vector.shape_cast %24 : vector<1x256x128xf32> to vector<256x128xf32>
    %cst_23 = arith.constant dense<0.000000e+00> : vector<128x128xf32>
    %26 = tpu.matmul %23, %25, %cst_23 {dimension_numbers = #tpu.dot_dimension_numbers<[1], [0], [0], [1], [0, 0, 1, 1], [], []>} : vector<128x256xf32>, vector<256x128xf32>, vector<128x128xf32> -> vector<128x128xf32>
    %c0_24 = arith.constant 0 : index
    %c0_25 = arith.constant 0 : index
    %c0_26 = arith.constant 0 : index
    %27 = vector.load %arg5[%c0_24, %c0_25, %c0_26] : memref<4x1x128xf32, #tpu.memory_space<vmem>>, vector<1x1x128xf32>
    %28 = vector.shape_cast %27 : vector<1x1x128xf32> to vector<1x128xf32>
    %29 = vector.broadcast %28 : vector<1x128xf32> to vector<128x128xf32>
    %30 = arith.addf %26, %29 : vector<128x128xf32>
    %cst_27 = arith.constant 0.000000e+00 : f32
    %31 = vector.broadcast %cst_27 : f32 to vector<128x128xf32>
    %32 = arith.maximumf %30, %31 : vector<128x128xf32>
    %c0_28 = arith.constant 0 : index
    %c128_29 = arith.constant 128 : index
    %33 = vector.load %arg7[%c0_28, %c128_29] : memref<128x256xf32, #tpu.memory_space<vmem>>, vector<128x128xf32>
    tpu.vector_store %arg7[%c0_28, %c128_29], %32 {strides = array<i32>} : memref<128x256xf32, #tpu.memory_space<vmem>>, vector<128x128xf32>,
    %c0_30 = arith.constant 0 : index
    %c128_31 = arith.constant 128 : index
    %34 = vector.load %arg7[%c0_30, %c128_31] : memref<128x256xf32, #tpu.memory_space<vmem>>, vector<128x128xf32>
    %cst_32 = arith.constant dense<0.000000e+00> : vector<128x128xf32>
    %35 = tpu.matmul %12, %34, %cst_32 {dimension_numbers = #tpu.dot_dimension_numbers<[1], [0], [0], [1], [0, 0, 1, 1], [], []>} : vector<128x128xf32>, vector<128x128xf32>, vector<128x128xf32> -> vector<128x128xf32>
    %c0_33 = arith.constant 0 : index
    %c0_34 = arith.constant 0 : index
    %36 = vector.load %arg7[%c0_33, %c0_34] : memref<128x256xf32, #tpu.memory_space<vmem>>, vector<128x128xf32>
    tpu.vector_store %arg7[%c0_33, %c0_34], %35 {strides = array<i32>} : memref<128x256xf32, #tpu.memory_space<vmem>>, vector<128x128xf32>,
    %c0_35 = arith.constant 0 : index
    %c0_36 = arith.constant 0 : index
    %37 = vector.load %arg7[%c0_35, %c0_36] : memref<128x256xf32, #tpu.memory_space<vmem>>, vector<128x256xf32>
    %c1 = arith.constant 1 : index
    %c0_37 = arith.constant 0 : index
    %c0_38 = arith.constant 0 : index
    %38 = vector.load %arg8[%c1, %c0_37, %c0_38] : memref<4x256x128xf32, #tpu.memory_space<vmem>>, vector<1x256x128xf32>
    %39 = vector.shape_cast %38 : vector<1x256x128xf32> to vector<256x128xf32>
    %cst_39 = arith.constant dense<0.000000e+00> : vector<128x128xf32>
    %40 = tpu.matmul %37, %39, %cst_39 {dimension_numbers = #tpu.dot_dimension_numbers<[1], [0], [0], [1], [0, 0, 1, 1], [], []>} : vector<128x256xf32>, vector<256x128xf32>, vector<128x128xf32> -> vector<128x128xf32>
    %c1_40 = arith.constant 1 : index
    %c0_41 = arith.constant 0 : index
    %c0_42 = arith.constant 0 : index
    %41 = vector.load %arg5[%c1_40, %c0_41, %c0_42] : memref<4x1x128xf32, #tpu.memory_space<vmem>>, vector<1x1x128xf32>
    %42 = vector.shape_cast %41 : vector<1x1x128xf32> to vector<1x128xf32>
    %43 = vector.broadcast %42 : vector<1x128xf32> to vector<128x128xf32>
    %44 = arith.addf %40, %43 : vector<128x128xf32>
    %cst_43 = arith.constant 0.000000e+00 : f32
    %45 = vector.broadcast %cst_43 : f32 to vector<128x128xf32>
    %46 = arith.maximumf %44, %45 : vector<128x128xf32>
    %c0_44 = arith.constant 0 : index
    %c128_45 = arith.constant 128 : index
    %47 = vector.load %arg7[%c0_44, %c128_45] : memref<128x256xf32, #tpu.memory_space<vmem>>, vector<128x128xf32>
    tpu.vector_store %arg7[%c0_44, %c128_45], %46 {strides = array<i32>} : memref<128x256xf32, #tpu.memory_space<vmem>>, vector<128x128xf32>,
    %c0_46 = arith.constant 0 : index
    %c128_47 = arith.constant 128 : index
    %48 = vector.load %arg7[%c0_46, %c128_47] : memref<128x256xf32, #tpu.memory_space<vmem>>, vector<128x128xf32>
    %cst_48 = arith.constant dense<0.000000e+00> : vector<128x128xf32>
    %49 = tpu.matmul %12, %48, %cst_48 {dimension_numbers = #tpu.dot_dimension_numbers<[1], [0], [0], [1], [0, 0, 1, 1], [], []>} : vector<128x128xf32>, vector<128x128xf32>, vector<128x128xf32> -> vector<128x128xf32>
    %c0_49 = arith.constant 0 : index
    %c0_50 = arith.constant 0 : index
    %50 = vector.load %arg7[%c0_49, %c0_50] : memref<128x256xf32, #tpu.memory_space<vmem>>, vector<128x128xf32>
    tpu.vector_store %arg7[%c0_49, %c0_50], %49 {strides = array<i32>} : memref<128x256xf32, #tpu.memory_space<vmem>>, vector<128x128xf32>,
    %c0_51 = arith.constant 0 : index
    %c0_52 = arith.constant 0 : index
    %51 = vector.load %arg7[%c0_51, %c0_52] : memref<128x256xf32, #tpu.memory_space<vmem>>, vector<128x256xf32>
    %c2 = arith.constant 2 : index
    %c0_53 = arith.constant 0 : index
    %c0_54 = arith.constant 0 : index
    %52 = vector.load %arg8[%c2, %c0_53, %c0_54] : memref<4x256x128xf32, #tpu.memory_space<vmem>>, vector<1x256x128xf32>
    %53 = vector.shape_cast %52 : vector<1x256x128xf32> to vector<256x128xf32>
    %cst_55 = arith.constant dense<0.000000e+00> : vector<128x128xf32>
    %54 = tpu.matmul %51, %53, %cst_55 {dimension_numbers = #tpu.dot_dimension_numbers<[1], [0], [0], [1], [0, 0, 1, 1], [], []>} : vector<128x256xf32>, vector<256x128xf32>, vector<128x128xf32> -> vector<128x128xf32>
    %c2_56 = arith.constant 2 : index
    %c0_57 = arith.constant 0 : index
    %c0_58 = arith.constant 0 : index
    %55 = vector.load %arg5[%c2_56, %c0_57, %c0_58] : memref<4x1x128xf32, #tpu.memory_space<vmem>>, vector<1x1x128xf32>
    %56 = vector.shape_cast %55 : vector<1x1x128xf32> to vector<1x128xf32>
    %57 = vector.broadcast %56 : vector<1x128xf32> to vector<128x128xf32>
    %58 = arith.addf %54, %57 : vector<128x128xf32>
    %cst_59 = arith.constant 0.000000e+00 : f32
    %59 = vector.broadcast %cst_59 : f32 to vector<128x128xf32>
    %60 = arith.maximumf %58, %59 : vector<128x128xf32>
    %c0_60 = arith.constant 0 : index
    %c128_61 = arith.constant 128 : index
    %61 = vector.load %arg7[%c0_60, %c128_61] : memref<128x256xf32, #tpu.memory_space<vmem>>, vector<128x128xf32>
    tpu.vector_store %arg7[%c0_60, %c128_61], %60 {strides = array<i32>} : memref<128x256xf32, #tpu.memory_space<vmem>>, vector<128x128xf32>,
    %c0_62 = arith.constant 0 : index
    %c128_63 = arith.constant 128 : index
    %62 = vector.load %arg7[%c0_62, %c128_63] : memref<128x256xf32, #tpu.memory_space<vmem>>, vector<128x128xf32>
    %cst_64 = arith.constant dense<0.000000e+00> : vector<128x128xf32>
    %63 = tpu.matmul %12, %62, %cst_64 {dimension_numbers = #tpu.dot_dimension_numbers<[1], [0], [0], [1], [0, 0, 1, 1], [], []>} : vector<128x128xf32>, vector<128x128xf32>, vector<128x128xf32> -> vector<128x128xf32>
    %c0_65 = arith.constant 0 : index
    %c0_66 = arith.constant 0 : index
    %64 = vector.load %arg7[%c0_65, %c0_66] : memref<128x256xf32, #tpu.memory_space<vmem>>, vector<128x128xf32>
    tpu.vector_store %arg7[%c0_65, %c0_66], %63 {strides = array<i32>} : memref<128x256xf32, #tpu.memory_space<vmem>>, vector<128x128xf32>,
    %c0_67 = arith.constant 0 : index
    %c0_68 = arith.constant 0 : index
    %65 = vector.load %arg7[%c0_67, %c0_68] : memref<128x256xf32, #tpu.memory_space<vmem>>, vector<128x256xf32>
    %c3 = arith.constant 3 : index
    %c0_69 = arith.constant 0 : index
    %c0_70 = arith.constant 0 : index
    %66 = vector.load %arg8[%c3, %c0_69, %c0_70] : memref<4x256x128xf32, #tpu.memory_space<vmem>>, vector<1x256x128xf32>
    %67 = vector.shape_cast %66 : vector<1x256x128xf32> to vector<256x128xf32>
    %cst_71 = arith.constant dense<0.000000e+00> : vector<128x128xf32>
    %68 = tpu.matmul %65, %67, %cst_71 {dimension_numbers = #tpu.dot_dimension_numbers<[1], [0], [0], [1], [0, 0, 1, 1], [], []>} : vector<128x256xf32>, vector<256x128xf32>, vector<128x128xf32> -> vector<128x128xf32>
    %c3_72 = arith.constant 3 : index
    %c0_73 = arith.constant 0 : index
    %c0_74 = arith.constant 0 : index
    %69 = vector.load %arg5[%c3_72, %c0_73, %c0_74] : memref<4x1x128xf32, #tpu.memory_space<vmem>>, vector<1x1x128xf32>
    %70 = vector.shape_cast %69 : vector<1x1x128xf32> to vector<1x128xf32>
    %71 = vector.broadcast %70 : vector<1x128xf32> to vector<128x128xf32>
    %72 = arith.addf %68, %71 : vector<128x128xf32>
    %cst_75 = arith.constant 0.000000e+00 : f32
    %73 = vector.broadcast %cst_75 : f32 to vector<128x128xf32>
    %74 = arith.maximumf %72, %73 : vector<128x128xf32>
    %c0_76 = arith.constant 0 : index
    %c128_77 = arith.constant 128 : index
    %75 = vector.load %arg7[%c0_76, %c128_77] : memref<128x256xf32, #tpu.memory_space<vmem>>, vector<128x128xf32>
    tpu.vector_store %arg7[%c0_76, %c128_77], %74 {strides = array<i32>} : memref<128x256xf32, #tpu.memory_space<vmem>>, vector<128x128xf32>,
    %c0_78 = arith.constant 0 : index
    %c128_79 = arith.constant 128 : index
    %76 = vector.load %arg7[%c0_78, %c128_79] : memref<128x256xf32, #tpu.memory_space<vmem>>, vector<128x128xf32>
    %c0_80 = arith.constant 0 : index
    %c0_81 = arith.constant 0 : index
    %77 = vector.load %arg6[%c0_80, %c0_81] : memref<128x128xf32, #tpu.memory_space<vmem>>, vector<128x128xf32>
    tpu.vector_store %arg6[%c0_80, %c0_81], %76 {strides = array<i32>} : memref<128x128xf32, #tpu.memory_space<vmem>>, vector<128x128xf32>,
    return
  }
}

</mosaic_0001>

<llo_original>
// kernel: tpu_custom_call.1
$region0: #{tpu_custom_call.1}
  #allocation0 [shape = 'u32[]', space=smem, size = 0x4, offset = 0x4, fixed_abs, tag = 'smem constant byte address 0x4 - core index']
  #allocation1 [shape = 'u32[72,128]{1,0:T(1,128)}', space=vmem, size = 0x9000, scoped, tag = 'internal scratch']
  #allocation2 [shape = 'f32[128,256]{1,0:T(8,128)}', space=vmem, size = 0x20000, scoped, tag = 'scratch operand']
  #allocation3 [shape = 'f32[4,256,128]{2,1,0:T(8,128)}', space=vmem, size = 0x80000, scoped, tag = 'scratch operand']
  #allocation4 [shape = 's32[1]{0}', space=sflag, size = 0x4, scoped, tag = 'scratch operand']
  #allocation9 [shape = 's32[]', space=sflag, size = 0x4, offset = 0, fixed_abs, tag = 'sflag constant byte address 0x0 - dummy sync flag']
  #allocation10 [shape = 's32[]', space=sflag, size = 0x4, offset = 0, fixed_abs, tag = 'sflag constant byte address 0x0 - dummy sync flag']
  #allocation11 [shape = 'u32[]', space=smem, size = 0x4, offset = 0x44, fixed_abs, tag = 'smem constant byte address 0x44 - assertion arg 0']
  #allocation12 [shape = 'u32[]', space=smem, size = 0x4, offset = 0x48, fixed_abs, tag = 'smem constant byte address 0x48 - assertion arg 1']
  %s0 = inlined_call_operand.vmem [shape: f32[128,16], index: 0, kind: input, shape index: {}]
  %s1 = inlined_call_operand.vmem [shape: f32[128,128], index: 1, kind: input, shape index: {}]
  %s2 = inlined_call_operand.vmem [shape: f32[16,128], index: 2, kind: input, shape index: {}]
  %s3 = inlined_call_operand.vmem [shape: f32[1,128], index: 3, kind: input, shape index: {}]
  %s4 = inlined_call_operand.hbm [shape: f32[4,256,128], index: 4, kind: input, shape index: {}]
  %s5 = inlined_call_operand.hbm [shape: f32[4,1,128], index: 5, kind: input, shape index: {}]
  %s6 = inlined_call_operand.hbm [shape: f32[128,128], index: 6, kind: output, shape index: {}]
  %s7 = sld [smem:[#allocation0]]
  $region38: #{tpu_custom_call.1} parent=0
    _
  %s9 = ssub.s32 1, %s7
  %s10 = scalar_select 0, %s9, %s7
  $region1: #{tpu_custom_call.1} parent=0
    #allocation5 [shape = 'u8[2048]{0}', space=vmem, size = 0x800, scoped, tag = 'input window, operand 5, single buffered']
    #allocation6 [shape = 's32[1]{0}', space=sflag, size = 0x4, scoped, tag = 'scoped memory for tpu_custom_call.1']
    #allocation7 [shape = 's32[1]{0}', space=sflag, size = 0x4, scoped, tag = 'scoped memory for tpu_custom_call.1']
    #allocation8 [shape = 'u8[65536]{0}', space=vmem, size = 0x10000, scoped, tag = 'output window, operand 0, single buffered']
    %11 = vsyncpa [#allocation6], 0
    %12 = vsyncpa [#allocation7], 0
    // Predicated region
    $region2: #{tpu_custom_call.1} parent=1 // pred_check
      _
    $region3: #{tpu_custom_call.1} parent=1 // pred_check_branch
      %14 = sbr.rel (0) target = $region5
    $region4: #{tpu_custom_call.1} parent=1 // pred_region
      _
    $region5: #{tpu_custom_call.1} parent=1 // pred_fallthru
      _
    // Predicated region
    $region6: #{tpu_custom_call.1} parent=1 // pred_check
      _
    $region7: #{tpu_custom_call.1} parent=1 // pred_check_branch
      %16 = sbr.rel (0) target = $region9
    $region8: #{tpu_custom_call.1} parent=1 // pred_region
      _
    $region9: #{tpu_custom_call.1} parent=1 // pred_fallthru
      _
    // Predicated region
    $region10: #{tpu_custom_call.1} parent=1 // pred_check
      _
    $region11: #{tpu_custom_call.1} parent=1 // pred_check_branch
      %18 = sbr.rel (0) target = $region13
    $region12: #{tpu_custom_call.1} parent=1 // pred_region
      _
    $region13: #{tpu_custom_call.1} parent=1 // pred_fallthru
      _
    // Predicated region
    $region14: #{tpu_custom_call.1} parent=1 // pred_check
      _
    $region15: #{tpu_custom_call.1} parent=1 // pred_check_branch
      %20 = sbr.rel (0) target = $region17
    $region16: #{tpu_custom_call.1} parent=1 // pred_region
      _
    $region17: #{tpu_custom_call.1} parent=1 // pred_fallthru
      _
    // Predicated region
    $region18: #{tpu_custom_call.1} parent=1 // pred_check
      _
    $region19: #{tpu_custom_call.1} parent=1 // pred_check_branch
      %22 = sbr.rel (0) target = $region21
    $region20: #{tpu_custom_call.1} parent=1 // pred_region
      %24 = vsyncadd [#allocation6], 0
      %s25 = sshll.u32 %s5, 4
      %s26 = int_to_ptr.hbm [resolvable:$true] %s25
      %s27 = sshll.u32 [#allocation5], 4
      %s28 = int_to_ptr.vmem [resolvable:$true] %s27
      %33 = dma.hbm_to_vmem [thread:$0]  %s26, 64, %s28, [#allocation6], 16, 16, 1
    $region21: #{tpu_custom_call.1} parent=1 // pred_fallthru
      _
    // Predicated region
    $region22: #{tpu_custom_call.1} parent=1 // pred_check
      _
    $region23: #{tpu_custom_call.1} parent=1 // pred_check_branch
      %35 = sbr.rel (0) target = $region25
    $region24: #{tpu_custom_call.1} parent=1 // pred_region
      %37 = dma.done [#allocation6], 64
    $region25: #{tpu_custom_call.1} parent=1 // pred_fallthru
      _
    // Predicated region
    $region26: #{tpu_custom_call.1} parent=1 // pred_check
      _
    $region27: #{tpu_custom_call.1} parent=1 // pred_check_branch
      %39 = sbr.rel target = $region29
    $region28: #{tpu_custom_call.1} parent=1 // pred_region
      %40 = sst [smem:[#allocation11]] [#allocation10]
      %41 = sst [smem:[#allocation12]] [#allocation9]
    $region29: #{tpu_custom_call.1} parent=1 // pred_fallthru
      _
    %43 = shalt.err (0)
    %s45 = sshll.u32 %s4, 4
    %s46 = int_to_ptr.hbm [resolvable:$true] %s45
    %s47 = sshll.u32 [#allocation3], 4
    %s48 = int_to_ptr.vmem [resolvable:$true] %s47
    %50 = dma.hbm_to_vmem [thread:$0]  %s46, 16384, %s48, [#allocation4]
    %v51 = vld [vmem:[%s1] sm:$0xff]
    %v52 = vld [vmem:[%s1 + $0x8] sm:$0xff]
    %v53 = vld [vmem:[%s1 + $0x10] sm:$0xff]
    %v54 = vld [vmem:[%s1 + $0x18] sm:$0xff]
    %v55 = vld [vmem:[%s1 + $0x20] sm:$0xff]
    %v56 = vld [vmem:[%s1 + $0x28] sm:$0xff]
    %v57 = vld [vmem:[%s1 + $0x30] sm:$0xff]
    %v58 = vld [vmem:[%s1 + $0x38] sm:$0xff]
    %v59 = vld [vmem:[%s1 + $0x40] sm:$0xff]
    %v60 = vld [vmem:[%s1 + $0x48] sm:$0xff]
    %v61 = vld [vmem:[%s1 + $0x50] sm:$0xff]
    %v62 = vld [vmem:[%s1 + $0x58] sm:$0xff]
    %v63 = vld [vmem:[%s1 + $0x60] sm:$0xff]
    %v64 = vld [vmem:[%s1 + $0x68] sm:$0xff]
    %v65 = vld [vmem:[%s1 + $0x70] sm:$0xff]
    %v66 = vld [vmem:[%s1 + $0x78] sm:$0xff]
    %67 = vadd.xlane.f32.xlu0 %v51
    %v68 = vpop.xlane.xlu0 %67
    %69 = vadd.xlane.f32.xlu0 %v52
    %v70 = vpop.xlane.xlu0 %69
    %71 = vadd.xlane.f32.xlu0 %v53
    %v72 = vpop.xlane.xlu0 %71
    %73 = vadd.xlane.f32.xlu0 %v54
    %v74 = vpop.xlane.xlu0 %73
    %75 = vadd.xlane.f32.xlu0 %v55
    %v76 = vpop.xlane.xlu0 %75
    %77 = vadd.xlane.f32.xlu0 %v56
    %v78 = vpop.xlane.xlu0 %77
    %79 = vadd.xlane.f32.xlu0 %v57
    %v80 = vpop.xlane.xlu0 %79
    %81 = vadd.xlane.f32.xlu0 %v58
    %v82 = vpop.xlane.xlu0 %81
    %83 = vadd.xlane.f32.xlu0 %v59
    %v84 = vpop.xlane.xlu0 %83
    %85 = vadd.xlane.f32.xlu0 %v60
    %v86 = vpop.xlane.xlu0 %85
    %87 = vadd.xlane.f32.xlu0 %v61
    %v88 = vpop.xlane.xlu0 %87
    %89 = vadd.xlane.f32.xlu0 %v62
    %v90 = vpop.xlane.xlu0 %89
    %91 = vadd.xlane.f32.xlu0 %v63
    %v92 = vpop.xlane.xlu0 %91
    %93 = vadd.xlane.f32.xlu0 %v64
    %v94 = vpop.xlane.xlu0 %93
    %95 = vadd.xlane.f32.xlu0 %v65
    %v96 = vpop.xlane.xlu0 %95
    %97 = vadd.xlane.f32.xlu0 %v66
    %v98 = vpop.xlane.xlu0 %97
    %vm99 = vcmp.gt.f32.partialorder %v68, 0.0
    %vm100 = vcmp.gt.f32.partialorder %v70, 0.0
    %vm101 = vcmp.gt.f32.partialorder %v72, 0.0
    %vm102 = vcmp.gt.f32.partialorder %v74, 0.0
    %vm103 = vcmp.gt.f32.partialorder %v76, 0.0
    %vm104 = vcmp.gt.f32.partialorder %v78, 0.0
    %vm105 = vcmp.gt.f32.partialorder %v80, 0.0
    %vm106 = vcmp.gt.f32.partialorder %v82, 0.0
    %vm107 = vcmp.gt.f32.partialorder %v84, 0.0
    %vm108 = vcmp.gt.f32.partialorder %v86, 0.0
    %vm109 = vcmp.gt.f32.partialorder %v88, 0.0
    %vm110 = vcmp.gt.f32.partialorder %v90, 0.0
    %vm111 = vcmp.gt.f32.partialorder %v92, 0.0
    %vm112 = vcmp.gt.f32.partialorder %v94, 0.0
    %vm113 = vcmp.gt.f32.partialorder %v96, 0.0
    %vm114 = vcmp.gt.f32.partialorder %v98, 0.0
    %v115 = vmax.f32 %v68, 1.0
    %v116 = vmax.f32 %v70, 1.0
    %v117 = vmax.f32 %v72, 1.0
    %v118 = vmax.f32 %v74, 1.0
    %v119 = vmax.f32 %v76, 1.0
    %v120 = vmax.f32 %v78, 1.0
    %v121 = vmax.f32 %v80, 1.0
    %v122 = vmax.f32 %v82, 1.0
    %v123 = vmax.f32 %v84, 1.0
    %v124 = vmax.f32 %v86, 1.0
    %v125 = vmax.f32 %v88, 1.0
    %v126 = vmax.f32 %v90, 1.0
    %v127 = vmax.f32 %v92, 1.0
    %v128 = vmax.f32 %v94, 1.0
    %v129 = vmax.f32 %v96, 1.0
    %v130 = vmax.f32 %v98, 1.0
    %v131 = vrcp.pop %v115
    %v132 = vmul.f32 %v115, %v131
    %v133 = vsub.f32 1.0, %v132
    %v134 = vmul.f32 %v131, %v133
    %v135 = vadd.f32 %v131, %v134
    %vm136 = vweird.f32 %v115
    %vm137 = vweird.f32 %v131
    %vm138 = vmor %vm136, %vm137
    %v139 = vsel %vm138, %v131, %v135
    %v140 = vand.u32 2147483647, %v115
    %vm141 = vcmp.eq.f32.partialorder %v140, 8.507059e+37
    %v142 = vand.u32 %v115, 2147483648
    %v143 = vor.u32 1.1754944e-38, %v142
    %v144 = vsel %vm141, %v143, %v139
    %v145 = vmul.f32 1.0, %v144
    %v146 = vrcp.pop %v116
    %v147 = vmul.f32 %v116, %v146
    %v148 = vsub.f32 1.0, %v147
    %v149 = vmul.f32 %v146, %v148
    %v150 = vadd.f32 %v146, %v149
    %vm151 = vweird.f32 %v116
    %vm152 = vweird.f32 %v146
    %vm153 = vmor %vm151, %vm152
    %v154 = vsel %vm153, %v146, %v150
    %v155 = vand.u32 2147483647, %v116
    %vm156 = vcmp.eq.f32.partialorder %v155, 8.507059e+37
    %v157 = vand.u32 %v116, 2147483648
    %v158 = vor.u32 1.1754944e-38, %v157
    %v159 = vsel %vm156, %v158, %v154
    %v160 = vmul.f32 1.0, %v159
    %v161 = vrcp.pop %v117
    %v162 = vmul.f32 %v117, %v161
    %v163 = vsub.f32 1.0, %v162
    %v164 = vmul.f32 %v161, %v163
    %v165 = vadd.f32 %v161, %v164
    %vm166 = vweird.f32 %v117
    %vm167 = vweird.f32 %v161
    %vm168 = vmor %vm166, %vm167
    %v169 = vsel %vm168, %v161, %v165
    %v170 = vand.u32 2147483647, %v117
    %vm171 = vcmp.eq.f32.partialorder %v170, 8.507059e+37
    %v172 = vand.u32 %v117, 2147483648
    %v173 = vor.u32 1.1754944e-38, %v172
    %v174 = vsel %vm171, %v173, %v169
    %v175 = vmul.f32 1.0, %v174
    %v176 = vrcp.pop %v118
    %v177 = vmul.f32 %v118, %v176
    %v178 = vsub.f32 1.0, %v177
    %v179 = vmul.f32 %v176, %v178
    %v180 = vadd.f32 %v176, %v179
    %vm181 = vweird.f32 %v118
    %vm182 = vweird.f32 %v176
    %vm183 = vmor %vm181, %vm182
    %v184 = vsel %vm183, %v176, %v180
    %v185 = vand.u32 2147483647, %v118
    %vm186 = vcmp.eq.f32.partialorder %v185, 8.507059e+37
    %v187 = vand.u32 %v118, 2147483648
    %v188 = vor.u32 1.1754944e-38, %v187
    %v189 = vsel %vm186, %v188, %v184
    %v190 = vmul.f32 1.0, %v189
    %v191 = vrcp.pop %v119
    %v192 = vmul.f32 %v119, %v191
    %v193 = vsub.f32 1.0, %v192
    %v194 = vmul.f32 %v191, %v193
    %v195 = vadd.f32 %v191, %v194
    %vm196 = vweird.f32 %v119
    %vm197 = vweird.f32 %v191
    %vm198 = vmor %vm196, %vm197
    %v199 = vsel %vm198, %v191, %v195
    %v200 = vand.u32 2147483647, %v119
    %vm201 = vcmp.eq.f32.partialorder %v200, 8.507059e+37
    %v202 = vand.u32 %v119, 2147483648
    %v203 = vor.u32 1.1754944e-38, %v202
    %v204 = vsel %vm201, %v203, %v199
    %v205 = vmul.f32 1.0, %v204
    %v206 = vrcp.pop %v120
    %v207 = vmul.f32 %v120, %v206
    %v208 = vsub.f32 1.0, %v207
    %v209 = vmul.f32 %v206, %v208
    %v210 = vadd.f32 %v206, %v209
    %vm211 = vweird.f32 %v120
    %vm212 = vweird.f32 %v206
    %vm213 = vmor %vm211, %vm212
    %v214 = vsel %vm213, %v206, %v210
    %v215 = vand.u32 2147483647, %v120
    %vm216 = vcmp.eq.f32.partialorder %v215, 8.507059e+37
    %v217 = vand.u32 %v120, 2147483648
    %v218 = vor.u32 1.1754944e-38, %v217
    %v219 = vsel %vm216, %v218, %v214
    %v220 = vmul.f32 1.0, %v219
    %v221 = vrcp.pop %v121
    %v222 = vmul.f32 %v121, %v221
    %v223 = vsub.f32 1.0, %v222
    %v224 = vmul.f32 %v221, %v223
    %v225 = vadd.f32 %v221, %v224
    %vm226 = vweird.f32 %v121
    %vm227 = vweird.f32 %v221
    %vm228 = vmor %vm226, %vm227
    %v229 = vsel %vm228, %v221, %v225
    %v230 = vand.u32 2147483647, %v121
    %vm231 = vcmp.eq.f32.partialorder %v230, 8.507059e+37
    %v232 = vand.u32 %v121, 2147483648
    %v233 = vor.u32 1.1754944e-38, %v232
    %v234 = vsel %vm231, %v233, %v229
    %v235 = vmul.f32 1.0, %v234
    %v236 = vrcp.pop %v122
    %v237 = vmul.f32 %v122, %v236
    %v238 = vsub.f32 1.0, %v237
    %v239 = vmul.f32 %v236, %v238
    %v240 = vadd.f32 %v236, %v239
    %vm241 = vweird.f32 %v122
    %vm242 = vweird.f32 %v236
    %vm243 = vmor %vm241, %vm242
    %v244 = vsel %vm243, %v236, %v240
    %v245 = vand.u32 2147483647, %v122
    %vm246 = vcmp.eq.f32.partialorder %v245, 8.507059e+37
    %v247 = vand.u32 %v122, 2147483648
    %v248 = vor.u32 1.1754944e-38, %v247
    %v249 = vsel %vm246, %v248, %v244
    %v250 = vmul.f32 1.0, %v249
    %v251 = vrcp.pop %v123
    %v252 = vmul.f32 %v123, %v251
    %v253 = vsub.f32 1.0, %v252
    %v254 = vmul.f32 %v251, %v253
    %v255 = vadd.f32 %v251, %v254
    %vm256 = vweird.f32 %v123
    %vm257 = vweird.f32 %v251
    %vm258 = vmor %vm256, %vm257
    %v259 = vsel %vm258, %v251, %v255
    %v260 = vand.u32 2147483647, %v123
    %vm261 = vcmp.eq.f32.partialorder %v260, 8.507059e+37
    %v262 = vand.u32 %v123, 2147483648
    %v263 = vor.u32 1.1754944e-38, %v262
    %v264 = vsel %vm261, %v263, %v259
    %v265 = vmul.f32 1.0, %v264
    %v266 = vrcp.pop %v124
    %v267 = vmul.f32 %v124, %v266
    %v268 = vsub.f32 1.0, %v267
    %v269 = vmul.f32 %v266, %v268
    %v270 = vadd.f32 %v266, %v269
    %vm271 = vweird.f32 %v124
    %vm272 = vweird.f32 %v266
    %vm273 = vmor %vm271, %vm272
    %v274 = vsel %vm273, %v266, %v270
    %v275 = vand.u32 2147483647, %v124
    %vm276 = vcmp.eq.f32.partialorder %v275, 8.507059e+37
    %v277 = vand.u32 %v124, 2147483648
    %v278 = vor.u32 1.1754944e-38, %v277
    %v279 = vsel %vm276, %v278, %v274
    %v280 = vmul.f32 1.0, %v279
    %v281 = vrcp.pop %v125
    %v282 = vmul.f32 %v125, %v281
    %v283 = vsub.f32 1.0, %v282
    %v284 = vmul.f32 %v281, %v283
    %v285 = vadd.f32 %v281, %v284
    %vm286 = vweird.f32 %v125
    %vm287 = vweird.f32 %v281
    %vm288 = vmor %vm286, %vm287
    %v289 = vsel %vm288, %v281, %v285
    %v290 = vand.u32 2147483647, %v125
    %vm291 = vcmp.eq.f32.partialorder %v290, 8.507059e+37
    %v292 = vand.u32 %v125, 2147483648
    %v293 = vor.u32 1.1754944e-38, %v292
    %v294 = vsel %vm291, %v293, %v289
    %v295 = vmul.f32 1.0, %v294
    %v296 = vrcp.pop %v126
    %v297 = vmul.f32 %v126, %v296
    %v298 = vsub.f32 1.0, %v297
    %v299 = vmul.f32 %v296, %v298
    %v300 = vadd.f32 %v296, %v299
    %vm301 = vweird.f32 %v126
    %vm302 = vweird.f32 %v296
    %vm303 = vmor %vm301, %vm302
    %v304 = vsel %vm303, %v296, %v300
    %v305 = vand.u32 2147483647, %v126
    %vm306 = vcmp.eq.f32.partialorder %v305, 8.507059e+37
    %v307 = vand.u32 %v126, 2147483648
    %v308 = vor.u32 1.1754944e-38, %v307
    %v309 = vsel %vm306, %v308, %v304
    %v310 = vmul.f32 1.0, %v309
    %v311 = vrcp.pop %v127
    %v312 = vmul.f32 %v127, %v311
    %v313 = vsub.f32 1.0, %v312
    %v314 = vmul.f32 %v311, %v313
    %v315 = vadd.f32 %v311, %v314
    %vm316 = vweird.f32 %v127
    %vm317 = vweird.f32 %v311
    %vm318 = vmor %vm316, %vm317
    %v319 = vsel %vm318, %v311, %v315
    %v320 = vand.u32 2147483647, %v127
    %vm321 = vcmp.eq.f32.partialorder %v320, 8.507059e+37
    %v322 = vand.u32 %v127, 2147483648
    %v323 = vor.u32 1.1754944e-38, %v322
    %v324 = vsel %vm321, %v323, %v319
    %v325 = vmul.f32 1.0, %v324
    %v326 = vrcp.pop %v128
    %v327 = vmul.f32 %v128, %v326
    %v328 = vsub.f32 1.0, %v327
    %v329 = vmul.f32 %v326, %v328
    %v330 = vadd.f32 %v326, %v329
    %vm331 = vweird.f32 %v128
    %vm332 = vweird.f32 %v326
    %vm333 = vmor %vm331, %vm332
    %v334 = vsel %vm333, %v326, %v330
    %v335 = vand.u32 2147483647, %v128
    %vm336 = vcmp.eq.f32.partialorder %v335, 8.507059e+37
    %v337 = vand.u32 %v128, 2147483648
    %v338 = vor.u32 1.1754944e-38, %v337
    %v339 = vsel %vm336, %v338, %v334
    %v340 = vmul.f32 1.0, %v339
    %v341 = vrcp.pop %v129
    %v342 = vmul.f32 %v129, %v341
    %v343 = vsub.f32 1.0, %v342
    %v344 = vmul.f32 %v341, %v343
    %v345 = vadd.f32 %v341, %v344
    %vm346 = vweird.f32 %v129
    %vm347 = vweird.f32 %v341
    %vm348 = vmor %vm346, %vm347
    %v349 = vsel %vm348, %v341, %v345
    %v350 = vand.u32 2147483647, %v129
    %vm351 = vcmp.eq.f32.partialorder %v350, 8.507059e+37
    %v352 = vand.u32 %v129, 2147483648
    %v353 = vor.u32 1.1754944e-38, %v352
    %v354 = vsel %vm351, %v353, %v349
    %v355 = vmul.f32 1.0, %v354
    %v356 = vrcp.pop %v130
    %v357 = vmul.f32 %v130, %v356
    %v358 = vsub.f32 1.0, %v357
    %v359 = vmul.f32 %v356, %v358
    %v360 = vadd.f32 %v356, %v359
    %vm361 = vweird.f32 %v130
    %vm362 = vweird.f32 %v356
    %vm363 = vmor %vm361, %vm362
    %v364 = vsel %vm363, %v356, %v360
    %v365 = vand.u32 2147483647, %v130
    %vm366 = vcmp.eq.f32.partialorder %v365, 8.507059e+37
    %v367 = vand.u32 %v130, 2147483648
    %v368 = vor.u32 1.1754944e-38, %v367
    %v369 = vsel %vm366, %v368, %v364
    %v370 = vmul.f32 1.0, %v369
    %v371 = vsel %vm99, %v145, 0.0
    %v372 = vsel %vm100, %v160, 0.0
    %v373 = vsel %vm101, %v175, 0.0
    %v374 = vsel %vm102, %v190, 0.0
    %v375 = vsel %vm103, %v205, 0.0
    %v376 = vsel %vm104, %v220, 0.0
    %v377 = vsel %vm105, %v235, 0.0
    %v378 = vsel %vm106, %v250, 0.0
    %v379 = vsel %vm107, %v265, 0.0
    %v380 = vsel %vm108, %v280, 0.0
    %v381 = vsel %vm109, %v295, 0.0
    %v382 = vsel %vm110, %v310, 0.0
    %v383 = vsel %vm111, %v325, 0.0
    %v384 = vsel %vm112, %v340, 0.0
    %v385 = vsel %vm113, %v355, 0.0
    %v386 = vsel %vm114, %v370, 0.0
    %v387 = vmul.f32 %v51, %v371
    %v388 = vmul.f32 %v52, %v372
    %v389 = vmul.f32 %v53, %v373
    %v390 = vmul.f32 %v54, %v374
    %v391 = vmul.f32 %v55, %v375
    %v392 = vmul.f32 %v56, %v376
    %v393 = vmul.f32 %v57, %v377
    %v394 = vmul.f32 %v58, %v378
    %v395 = vmul.f32 %v59, %v379
    %v396 = vmul.f32 %v60, %v380
    %v397 = vmul.f32 %v61, %v381
    %v398 = vmul.f32 %v62, %v382
    %v399 = vmul.f32 %v63, %v383
    %v400 = vmul.f32 %v64, %v384
    %v401 = vmul.f32 %v65, %v385
    %v402 = vmul.f32 %v66, %v386
    %v403 = vld [vmem:[%s0] sm:$0xff]
    %v404 = vld [vmem:[%s0 + $0x8] sm:$0xff]
    %v405 = vld [vmem:[%s0 + $0x10] sm:$0xff]
    %v406 = vld [vmem:[%s0 + $0x18] sm:$0xff]
    %v407 = vld [vmem:[%s0 + $0x20] sm:$0xff]
    %v408 = vld [vmem:[%s0 + $0x28] sm:$0xff]
    %v409 = vld [vmem:[%s0 + $0x30] sm:$0xff]
    %v410 = vld [vmem:[%s0 + $0x38] sm:$0xff]
    %v411 = vld [vmem:[%s0 + $0x40] sm:$0xff]
    %v412 = vld [vmem:[%s0 + $0x48] sm:$0xff]
    %v413 = vld [vmem:[%s0 + $0x50] sm:$0xff]
    %v414 = vld [vmem:[%s0 + $0x58] sm:$0xff]
    %v415 = vld [vmem:[%s0 + $0x60] sm:$0xff]
    %v416 = vld [vmem:[%s0 + $0x68] sm:$0xff]
    %v417 = vld [vmem:[%s0 + $0x70] sm:$0xff]
    %v418 = vld [vmem:[%s0 + $0x78] sm:$0xff]
    %v419 = vld [vmem:[%s2] sm:$0xff]
    %v420 = vld [vmem:[%s2 + $0x8] sm:$0xff]
    %v421 = vld [vmem:[%s3] sm:$0x1]
    %v423 = vperm.slane %v421, 0
    %vm425 = vcmask 130048
    %v427 = vsel %vm425, %v403, 0
    %v430 = vsel %vm425, %v404, 0
    %v433 = vsel %vm425, %v405, 0
    %v436 = vsel %vm425, %v406, 0
    %v439 = vsel %vm425, %v407, 0
    %v442 = vsel %vm425, %v408, 0
    %v445 = vsel %vm425, %v409, 0
    %v448 = vsel %vm425, %v410, 0
    %v451 = vsel %vm425, %v411, 0
    %v454 = vsel %vm425, %v412, 0
    %v457 = vsel %vm425, %v413, 0
    %v460 = vsel %vm425, %v414, 0
    %v463 = vsel %vm425, %v415, 0
    %v466 = vsel %vm425, %v416, 0
    %v469 = vsel %vm425, %v417, 0
    %v472 = vsel %vm425, %v418, 0
    %474 = vmatpush.msra.mxu0 0.0
    %475 = vmatpush.msra.mxu0 0.0
    %476 = vmatpush.msra.mxu0 0.0
    %477 = vmatpush.msra.mxu0 0.0
    %478 = vmatpush.msra.mxu0 0.0
    %479 = vmatpush.msra.mxu0 0.0
    %480 = vmatpush.msra.mxu0 0.0
    %481 = vmatpush.msra.mxu0 0.0
    %482 = vmatpush.msra.mxu0 0.0
    %483 = vmatpush.msra.mxu0 0.0
    %484 = vmatpush.msra.mxu0 0.0
    %485 = vmatpush.msra.mxu0 0.0
    %486 = vmatpush.msra.mxu0 0.0
    %487 = vmatpush.msra.mxu0 0.0
    %488 = vmatpush.msra.mxu0 %v420
    %489 = vmatpush.msra.mxu0 %v419
    %490 = vmatmul.f32.gmra.mxu0 %v427
    %v491 = vpop.f32.mrf.mxu0
    %v492 = vadd.f32 %v423, %v491
    %493 = vmatmul.f32.gmra.mxu0 %v430
    %v494 = vpop.f32.mrf.mxu0
    %v495 = vadd.f32 %v423, %v494
    %496 = vmatmul.f32.gmra.mxu0 %v433
    %v497 = vpop.f32.mrf.mxu0
    %v498 = vadd.f32 %v423, %v497
    %499 = vmatmul.f32.gmra.mxu0 %v436
    %v500 = vpop.f32.mrf.mxu0
    %v501 = vadd.f32 %v423, %v500
    %502 = vmatmul.f32.gmra.mxu0 %v439
    %v503 = vpop.f32.mrf.mxu0
    %v504 = vadd.f32 %v423, %v503
    %505 = vmatmul.f32.gmra.mxu0 %v442
    %v506 = vpop.f32.mrf.mxu0
    %v507 = vadd.f32 %v423, %v506
    %508 = vmatmul.f32.gmra.mxu0 %v445
    %v509 = vpop.f32.mrf.mxu0
    %v510 = vadd.f32 %v423, %v509
    %511 = vmatmul.f32.gmra.mxu0 %v448
    %v512 = vpop.f32.mrf.mxu0
    %v513 = vadd.f32 %v423, %v512
    %514 = vmatmul.f32.gmra.mxu0 %v451
    %v515 = vpop.f32.mrf.mxu0
    %v516 = vadd.f32 %v423, %v515
    %517 = vmatmul.f32.gmra.mxu0 %v454
    %v518 = vpop.f32.mrf.mxu0
    %v519 = vadd.f32 %v423, %v518
    %520 = vmatmul.f32.gmra.mxu0 %v457
    %v521 = vpop.f32.mrf.mxu0
    %v522 = vadd.f32 %v423, %v521
    %523 = vmatmul.f32.gmra.mxu0 %v460
    %v524 = vpop.f32.mrf.mxu0
    %v525 = vadd.f32 %v423, %v524
    %526 = vmatmul.f32.gmra.mxu0 %v463
    %v527 = vpop.f32.mrf.mxu0
    %v528 = vadd.f32 %v423, %v527
    %529 = vmatmul.f32.gmra.mxu0 %v466
    %v530 = vpop.f32.mrf.mxu0
    %v531 = vadd.f32 %v423, %v530
    %532 = vmatmul.f32.gmra.mxu0 %v469
    %v533 = vpop.f32.mrf.mxu0
    %v534 = vadd.f32 %v423, %v533
    %535 = vmatmul.f32.gmra.mxu0 %v472
    %v536 = vpop.f32.mrf.mxu0
    %v537 = vadd.f32 %v423, %v536
    %538 = vdwg.mxu0
    %539 = vst [vmem:[#allocation2 + $0x8] sm:$0xff] %v492
    %540 = vst [vmem:[#allocation2 + $0x18] sm:$0xff] %v495
    %541 = vst [vmem:[#allocation2 + $0x28] sm:$0xff] %v498
    %542 = vst [vmem:[#allocation2 + $0x38] sm:$0xff] %v501
    %543 = vst [vmem:[#allocation2 + $0x48] sm:$0xff] %v504
    %544 = vst [vmem:[#allocation2 + $0x58] sm:$0xff] %v507
    %545 = vst [vmem:[#allocation2 + $0x68] sm:$0xff] %v510
    %546 = vst [vmem:[#allocation2 + $0x78] sm:$0xff] %v513
    %547 = vst [vmem:[#allocation2 + $0x88] sm:$0xff] %v516
    %548 = vst [vmem:[#allocation2 + $0x98] sm:$0xff] %v519
    %549 = vst [vmem:[#allocation2 + $0xa8] sm:$0xff] %v522
    %550 = vst [vmem:[#allocation2 + $0xb8] sm:$0xff] %v525
    %551 = vst [vmem:[#allocation2 + $0xc8] sm:$0xff] %v528
    %552 = vst [vmem:[#allocation2 + $0xd8] sm:$0xff] %v531
    %553 = vst [vmem:[#allocation2 + $0xe8] sm:$0xff] %v534
    %554 = vst [vmem:[#allocation2 + $0xf8] sm:$0xff] %v537
    %s555 = smul.u32 4, 256
    %s556 = smul.u32 %s555, 1
    %s557 = sshll.u32 %s556, 4
    %558 = dma.done [#allocation4], %s557
    %v559 = vld [vmem:[#allocation2 + $0x8] sm:$0xff]
    %v560 = vld [vmem:[#allocation2 + $0x18] sm:$0xff]
    %v561 = vld [vmem:[#allocation2 + $0x28] sm:$0xff]
    %v562 = vld [vmem:[#allocation2 + $0x38] sm:$0xff]
    %v563 = vld [vmem:[#allocation2 + $0x48] sm:$0xff]
    %v564 = vld [vmem:[#allocation2 + $0x58] sm:$0xff]
    %v565 = vld [vmem:[#allocation2 + $0x68] sm:$0xff]
    %v566 = vld [vmem:[#allocation2 + $0x78] sm:$0xff]
    %v567 = vld [vmem:[#allocation2 + $0x88] sm:$0xff]
    %v568 = vld [vmem:[#allocation2 + $0x98] sm:$0xff]
    %v569 = vld [vmem:[#allocation2 + $0xa8] sm:$0xff]
    %v570 = vld [vmem:[#allocation2 + $0xb8] sm:$0xff]
    %v571 = vld [vmem:[#allocation2 + $0xc8] sm:$0xff]
    %v572 = vld [vmem:[#allocation2 + $0xd8] sm:$0xff]
    %v573 = vld [vmem:[#allocation2 + $0xe8] sm:$0xff]
    %v574 = vld [vmem:[#allocation2 + $0xf8] sm:$0xff]
    %575 = vmatpush.msra.mxu0 %v574
    %576 = vmatpush.msra.mxu0 %v573
    %577 = vmatpush.msra.mxu0 %v572
    %578 = vmatpush.msra.mxu0 %v571
    %579 = vmatpush.msra.mxu0 %v570
    %580 = vmatpush.msra.mxu0 %v569
    %581 = vmatpush.msra.mxu0 %v568
    %582 = vmatpush.msra.mxu0 %v567
    %583 = vmatpush.msra.mxu0 %v566
    %584 = vmatpush.msra.mxu0 %v565
    %585 = vmatpush.msra.mxu0 %v564
    %586 = vmatpush.msra.mxu0 %v563
    %587 = vmatpush.msra.mxu0 %v562
    %588 = vmatpush.msra.mxu0 %v561
    %589 = vmatpush.msra.mxu0 %v560
    %590 = vmatpush.msra.mxu0 %v559
    %591 = vmatmul.f32.gmra.mxu0 %v387
    %v592 = vpop.f32.mrf.mxu0
    %v593 = vadd.f32 0.0, %v592
    %594 = vmatmul.f32.gmra.mxu0 %v388
    %v595 = vpop.f32.mrf.mxu0
    %v596 = vadd.f32 0.0, %v595
    %597 = vmatmul.f32.gmra.mxu0 %v389
    %v598 = vpop.f32.mrf.mxu0
    %v599 = vadd.f32 0.0, %v598
    %600 = vmatmul.f32.gmra.mxu0 %v390
    %v601 = vpop.f32.mrf.mxu0
    %v602 = vadd.f32 0.0, %v601
    %603 = vmatmul.f32.gmra.mxu0 %v391
    %v604 = vpop.f32.mrf.mxu0
    %v605 = vadd.f32 0.0, %v604
    %606 = vmatmul.f32.gmra.mxu0 %v392
    %v607 = vpop.f32.mrf.mxu0
    %v608 = vadd.f32 0.0, %v607
    %609 = vmatmul.f32.gmra.mxu0 %v393
    %v610 = vpop.f32.mrf.mxu0
    %v611 = vadd.f32 0.0, %v610
    %612 = vmatmul.f32.gmra.mxu0 %v394
    %v613 = vpop.f32.mrf.mxu0
    %v614 = vadd.f32 0.0, %v613
    %615 = vmatmul.f32.gmra.mxu0 %v395
    %v616 = vpop.f32.mrf.mxu0
    %v617 = vadd.f32 0.0, %v616
    %618 = vmatmul.f32.gmra.mxu0 %v396
    %v619 = vpop.f32.mrf.mxu0
    %v620 = vadd.f32 0.0, %v619
    %621 = vmatmul.f32.gmra.mxu0 %v397
    %v622 = vpop.f32.mrf.mxu0
    %v623 = vadd.f32 0.0, %v622
    %624 = vmatmul.f32.gmra.mxu0 %v398
    %v625 = vpop.f32.mrf.mxu0
    %v626 = vadd.f32 0.0, %v625
    %627 = vmatmul.f32.gmra.mxu0 %v399
    %v628 = vpop.f32.mrf.mxu0
    %v629 = vadd.f32 0.0, %v628
    %630 = vmatmul.f32.gmra.mxu0 %v400
    %v631 = vpop.f32.mrf.mxu0
    %v632 = vadd.f32 0.0, %v631
    %633 = vmatmul.f32.gmra.mxu0 %v401
    %v634 = vpop.f32.mrf.mxu0
    %v635 = vadd.f32 0.0, %v634
    %636 = vmatmul.f32.gmra.mxu0 %v402
    %v637 = vpop.f32.mrf.mxu0
    %v638 = vadd.f32 0.0, %v637
    %639 = vdwg.mxu0
    %640 = vst [vmem:[#allocation2] sm:$0xff] %v593
    %641 = vst [vmem:[#allocation2 + $0x10] sm:$0xff] %v596
    %642 = vst [vmem:[#allocation2 + $0x20] sm:$0xff] %v599
    %643 = vst [vmem:[#allocation2 + $0x30] sm:$0xff] %v602
    %644 = vst [vmem:[#allocation2 + $0x40] sm:$0xff] %v605
    %645 = vst [vmem:[#allocation2 + $0x50] sm:$0xff] %v608
    %646 = vst [vmem:[#allocation2 + $0x60] sm:$0xff] %v611
    %647 = vst [vmem:[#allocation2 + $0x70] sm:$0xff] %v614
    %648 = vst [vmem:[#allocation2 + $0x80] sm:$0xff] %v617
    %649 = vst [vmem:[#allocation2 + $0x90] sm:$0xff] %v620
    %650 = vst [vmem:[#allocation2 + $0xa0] sm:$0xff] %v623
    %651 = vst [vmem:[#allocation2 + $0xb0] sm:$0xff] %v626
    %652 = vst [vmem:[#allocation2 + $0xc0] sm:$0xff] %v629
    %653 = vst [vmem:[#allocation2 + $0xd0] sm:$0xff] %v632
    %654 = vst [vmem:[#allocation2 + $0xe0] sm:$0xff] %v635
    %655 = vst [vmem:[#allocation2 + $0xf0] sm:$0xff] %v638
    %v656 = vld [vmem:[#allocation2] sm:$0xff]
    %v657 = vld [vmem:[#allocation2 + $0x8] sm:$0xff]
    %v658 = vld [vmem:[#allocation2 + $0x10] sm:$0xff]
    %v659 = vld [vmem:[#allocation2 + $0x18] sm:$0xff]
    %v660 = vld [vmem:[#allocation2 + $0x20] sm:$0xff]
    %v661 = vld [vmem:[#allocation2 + $0x28] sm:$0xff]
    %v662 = vld [vmem:[#allocation2 + $0x30] sm:$0xff]
    %v663 = vld [vmem:[#allocation2 + $0x38] sm:$0xff]
    %v664 = vld [vmem:[#allocation2 + $0x40] sm:$0xff]
    %v665 = vld [vmem:[#allocation2 + $0x48] sm:$0xff]
    %v666 = vld [vmem:[#allocation2 + $0x50] sm:$0xff]
    %v667 = vld [vmem:[#allocation2 + $0x58] sm:$0xff]
    %v668 = vld [vmem:[#allocation2 + $0x60] sm:$0xff]
    %v669 = vld [vmem:[#allocation2 + $0x68] sm:$0xff]
    %v670 = vld [vmem:[#allocation2 + $0x70] sm:$0xff]
    %v671 = vld [vmem:[#allocation2 + $0x78] sm:$0xff]
    %v672 = vld [vmem:[#allocation2 + $0x80] sm:$0xff]
    %v673 = vld [vmem:[#allocation2 + $0x88] sm:$0xff]
    %v674 = vld [vmem:[#allocation2 + $0x90] sm:$0xff]
    %v675 = vld [vmem:[#allocation2 + $0x98] sm:$0xff]
    %v676 = vld [vmem:[#allocation2 + $0xa0] sm:$0xff]
    %v677 = vld [vmem:[#allocation2 + $0xa8] sm:$0xff]
    %v678 = vld [vmem:[#allocation2 + $0xb0] sm:$0xff]
    %v679 = vld [vmem:[#allocation2 + $0xb8] sm:$0xff]
    %v680 = vld [vmem:[#allocation2 + $0xc0] sm:$0xff]
    %v681 = vld [vmem:[#allocation2 + $0xc8] sm:$0xff]
    %v682 = vld [vmem:[#allocation2 + $0xd0] sm:$0xff]
    %v683 = vld [vmem:[#allocation2 + $0xd8] sm:$0xff]
    %v684 = vld [vmem:[#allocation2 + $0xe0] sm:$0xff]
    %v685 = vld [vmem:[#allocation2 + $0xe8] sm:$0xff]
    %v686 = vld [vmem:[#allocation2 + $0xf0] sm:$0xff]
    %v687 = vld [vmem:[#allocation2 + $0xf8] sm:$0xff]
    %v688 = vld [vmem:[#allocation3] sm:$0xff]
    %v689 = vld [vmem:[#allocation3 + $0x8] sm:$0xff]
    %v690 = vld [vmem:[#allocation3 + $0x10] sm:$0xff]
    %v691 = vld [vmem:[#allocation3 + $0x18] sm:$0xff]
    %v692 = vld [vmem:[#allocation3 + $0x20] sm:$0xff]
    %v693 = vld [vmem:[#allocation3 + $0x28] sm:$0xff]
    %v694 = vld [vmem:[#allocation3 + $0x30] sm:$0xff]
    %v695 = vld [vmem:[#allocation3 + $0x38] sm:$0xff]
    %v696 = vld [vmem:[#allocation3 + $0x40] sm:$0xff]
    %v697 = vld [vmem:[#allocation3 + $0x48] sm:$0xff]
    %v698 = vld [vmem:[#allocation3 + $0x50] sm:$0xff]
    %v699 = vld [vmem:[#allocation3 + $0x58] sm:$0xff]
    %v700 = vld [vmem:[#allocation3 + $0x60] sm:$0xff]
    %v701 = vld [vmem:[#allocation3 + $0x68] sm:$0xff]
    %v702 = vld [vmem:[#allocation3 + $0x70] sm:$0xff]
    %v703 = vld [vmem:[#allocation3 + $0x78] sm:$0xff]
    %v704 = vld [vmem:[#allocation3 + $0x80] sm:$0xff]
    %v705 = vld [vmem:[#allocation3 + $0x88] sm:$0xff]
    %v706 = vld [vmem:[#allocation3 + $0x90] sm:$0xff]
    %v707 = vld [vmem:[#allocation3 + $0x98] sm:$0xff]
    %v708 = vld [vmem:[#allocation3 + $0xa0] sm:$0xff]
    %v709 = vld [vmem:[#allocation3 + $0xa8] sm:$0xff]
    %v710 = vld [vmem:[#allocation3 + $0xb0] sm:$0xff]
    %v711 = vld [vmem:[#allocation3 + $0xb8] sm:$0xff]
    %v712 = vld [vmem:[#allocation3 + $0xc0] sm:$0xff]
    %v713 = vld [vmem:[#allocation3 + $0xc8] sm:$0xff]
    %v714 = vld [vmem:[#allocation3 + $0xd0] sm:$0xff]
    %v715 = vld [vmem:[#allocation3 + $0xd8] sm:$0xff]
    %v716 = vld [vmem:[#allocation3 + $0xe0] sm:$0xff]
    %v717 = vld [vmem:[#allocation3 + $0xe8] sm:$0xff]
    %v718 = vld [vmem:[#allocation3 + $0xf0] sm:$0xff]
    %v719 = vld [vmem:[#allocation3 + $0xf8] sm:$0xff]
    %v720 = vld [vmem:[#allocation5] sm:$0x1]
    %v722 = vperm.slane %v720, 0
    %724 = vmatpush.msra.mxu0 %v703
    %725 = vmatpush.msra.mxu0 %v702
    %726 = vmatpush.msra.mxu0 %v701
    %727 = vmatpush.msra.mxu0 %v700
    %728 = vmatpush.msra.mxu0 %v699
    %729 = vmatpush.msra.mxu0 %v698
    %730 = vmatpush.msra.mxu0 %v697
    %731 = vmatpush.msra.mxu0 %v696
    %732 = vmatpush.msra.mxu0 %v695
    %733 = vmatpush.msra.mxu0 %v694
    %734 = vmatpush.msra.mxu0 %v693
    %735 = vmatpush.msra.mxu0 %v692
    %736 = vmatpush.msra.mxu0 %v691
    %737 = vmatpush.msra.mxu0 %v690
    %738 = vmatpush.msra.mxu0 %v689
    %739 = vmatpush.msra.mxu0 %v688
    %740 = vmatmul.f32.gmra.mxu0 %v656
    %v741 = vpop.f32.mrf.mxu0
    %v742 = vadd.f32 %v722, %v741
    %743 = vmatmul.f32.gmra.mxu0 %v658
    %v744 = vpop.f32.mrf.mxu0
    %v745 = vadd.f32 %v722, %v744
    %746 = vmatmul.f32.gmra.mxu0 %v660
    %v747 = vpop.f32.mrf.mxu0
    %v748 = vadd.f32 %v722, %v747
    %749 = vmatmul.f32.gmra.mxu0 %v662
    %v750 = vpop.f32.mrf.mxu0
    %v751 = vadd.f32 %v722, %v750
    %752 = vmatmul.f32.gmra.mxu0 %v664
    %v753 = vpop.f32.mrf.mxu0
    %v754 = vadd.f32 %v722, %v753
    %755 = vmatmul.f32.gmra.mxu0 %v666
    %v756 = vpop.f32.mrf.mxu0
    %v757 = vadd.f32 %v722, %v756
    %758 = vmatmul.f32.gmra.mxu0 %v668
    %v759 = vpop.f32.mrf.mxu0
    %v760 = vadd.f32 %v722, %v759
    %761 = vmatmul.f32.gmra.mxu0 %v670
    %v762 = vpop.f32.mrf.mxu0
    %v763 = vadd.f32 %v722, %v762
    %764 = vmatmul.f32.gmra.mxu0 %v672
    %v765 = vpop.f32.mrf.mxu0
    %v766 = vadd.f32 %v722, %v765
    %767 = vmatmul.f32.gmra.mxu0 %v674
    %v768 = vpop.f32.mrf.mxu0
    %v769 = vadd.f32 %v722, %v768
    %770 = vmatmul.f32.gmra.mxu0 %v676
    %v771 = vpop.f32.mrf.mxu0
    %v772 = vadd.f32 %v722, %v771
    %773 = vmatmul.f32.gmra.mxu0 %v678
    %v774 = vpop.f32.mrf.mxu0
    %v775 = vadd.f32 %v722, %v774
    %776 = vmatmul.f32.gmra.mxu0 %v680
    %v777 = vpop.f32.mrf.mxu0
    %v778 = vadd.f32 %v722, %v777
    %779 = vmatmul.f32.gmra.mxu0 %v682
    %v780 = vpop.f32.mrf.mxu0
    %v781 = vadd.f32 %v722, %v780
    %782 = vmatmul.f32.gmra.mxu0 %v684
    %v783 = vpop.f32.mrf.mxu0
    %v784 = vadd.f32 %v722, %v783
    %785 = vmatmul.f32.gmra.mxu0 %v686
    %v786 = vpop.f32.mrf.mxu0
    %v787 = vadd.f32 %v722, %v786
    %788 = vdwg.mxu0
    %789 = vmatpush.msra.mxu0 %v719
    %790 = vmatpush.msra.mxu0 %v718
    %791 = vmatpush.msra.mxu0 %v717
    %792 = vmatpush.msra.mxu0 %v716
    %793 = vmatpush.msra.mxu0 %v715
    %794 = vmatpush.msra.mxu0 %v714
    %795 = vmatpush.msra.mxu0 %v713
    %796 = vmatpush.msra.mxu0 %v712
    %797 = vmatpush.msra.mxu0 %v711
    %798 = vmatpush.msra.mxu0 %v710
    %799 = vmatpush.msra.mxu0 %v709
    %800 = vmatpush.msra.mxu0 %v708
    %801 = vmatpush.msra.mxu0 %v707
    %802 = vmatpush.msra.mxu0 %v706
    %803 = vmatpush.msra.mxu0 %v705
    %804 = vmatpush.msra.mxu0 %v704
    %805 = vmatmul.f32.gmra.mxu0 %v657
    %v806 = vpop.f32.mrf.mxu0
    %v807 = vadd.f32 %v742, %v806
    %808 = vmatmul.f32.gmra.mxu0 %v659
    %v809 = vpop.f32.mrf.mxu0
    %v810 = vadd.f32 %v745, %v809
    %811 = vmatmul.f32.gmra.mxu0 %v661
    %v812 = vpop.f32.mrf.mxu0
    %v813 = vadd.f32 %v748, %v812
    %814 = vmatmul.f32.gmra.mxu0 %v663
    %v815 = vpop.f32.mrf.mxu0
    %v816 = vadd.f32 %v751, %v815
    %817 = vmatmul.f32.gmra.mxu0 %v665
    %v818 = vpop.f32.mrf.mxu0
    %v819 = vadd.f32 %v754, %v818
    %820 = vmatmul.f32.gmra.mxu0 %v667
    %v821 = vpop.f32.mrf.mxu0
    %v822 = vadd.f32 %v757, %v821
    %823 = vmatmul.f32.gmra.mxu0 %v669
    %v824 = vpop.f32.mrf.mxu0
    %v825 = vadd.f32 %v760, %v824
    %826 = vmatmul.f32.gmra.mxu0 %v671
    %v827 = vpop.f32.mrf.mxu0
    %v828 = vadd.f32 %v763, %v827
    %829 = vmatmul.f32.gmra.mxu0 %v673
    %v830 = vpop.f32.mrf.mxu0
    %v831 = vadd.f32 %v766, %v830
    %832 = vmatmul.f32.gmra.mxu0 %v675
    %v833 = vpop.f32.mrf.mxu0
    %v834 = vadd.f32 %v769, %v833
    %835 = vmatmul.f32.gmra.mxu0 %v677
    %v836 = vpop.f32.mrf.mxu0
    %v837 = vadd.f32 %v772, %v836
    %838 = vmatmul.f32.gmra.mxu0 %v679
    %v839 = vpop.f32.mrf.mxu0
    %v840 = vadd.f32 %v775, %v839
    %841 = vmatmul.f32.gmra.mxu0 %v681
    %v842 = vpop.f32.mrf.mxu0
    %v843 = vadd.f32 %v778, %v842
    %844 = vmatmul.f32.gmra.mxu0 %v683
    %v845 = vpop.f32.mrf.mxu0
    %v846 = vadd.f32 %v781, %v845
    %847 = vmatmul.f32.gmra.mxu0 %v685
    %v848 = vpop.f32.mrf.mxu0
    %v849 = vadd.f32 %v784, %v848
    %850 = vmatmul.f32.gmra.mxu0 %v687
    %v851 = vpop.f32.mrf.mxu0
    %v852 = vadd.f32 %v787, %v851
    %853 = vdwg.mxu0
    %v854 = vmax.f32 %v807, 0.0
    %v855 = vmax.f32 %v810, 0.0
    %v856 = vmax.f32 %v813, 0.0
    %v857 = vmax.f32 %v816, 0.0
    %v858 = vmax.f32 %v819, 0.0
    %v859 = vmax.f32 %v822, 0.0
    %v860 = vmax.f32 %v825, 0.0
    %v861 = vmax.f32 %v828, 0.0
    %v862 = vmax.f32 %v831, 0.0
    %v863 = vmax.f32 %v834, 0.0
    %v864 = vmax.f32 %v837, 0.0
    %v865 = vmax.f32 %v840, 0.0
    %v866 = vmax.f32 %v843, 0.0
    %v867 = vmax.f32 %v846, 0.0
    %v868 = vmax.f32 %v849, 0.0
    %v869 = vmax.f32 %v852, 0.0
    %870 = vst [vmem:[#allocation2 + $0x8] sm:$0xff] %v854
    %871 = vst [vmem:[#allocation2 + $0x18] sm:$0xff] %v855
    %872 = vst [vmem:[#allocation2 + $0x28] sm:$0xff] %v856
    %873 = vst [vmem:[#allocation2 + $0x38] sm:$0xff] %v857
    %874 = vst [vmem:[#allocation2 + $0x48] sm:$0xff] %v858
    %875 = vst [vmem:[#allocation2 + $0x58] sm:$0xff] %v859
    %876 = vst [vmem:[#allocation2 + $0x68] sm:$0xff] %v860
    %877 = vst [vmem:[#allocation2 + $0x78] sm:$0xff] %v861
    %878 = vst [vmem:[#allocation2 + $0x88] sm:$0xff] %v862
    %879 = vst [vmem:[#allocation2 + $0x98] sm:$0xff] %v863
    %880 = vst [vmem:[#allocation2 + $0xa8] sm:$0xff] %v864
    %881 = vst [vmem:[#allocation2 + $0xb8] sm:$0xff] %v865
    %882 = vst [vmem:[#allocation2 + $0xc8] sm:$0xff] %v866
    %883 = vst [vmem:[#allocation2 + $0xd8] sm:$0xff] %v867
    %884 = vst [vmem:[#allocation2 + $0xe8] sm:$0xff] %v868
    %885 = vst [vmem:[#allocation2 + $0xf8] sm:$0xff] %v869
    %v886 = vld [vmem:[#allocation2 + $0x8] sm:$0xff]
    %v887 = vld [vmem:[#allocation2 + $0x18] sm:$0xff]
    %v888 = vld [vmem:[#allocation2 + $0x28] sm:$0xff]
    %v889 = vld [vmem:[#allocation2 + $0x38] sm:$0xff]
    %v890 = vld [vmem:[#allocation2 + $0x48] sm:$0xff]
    %v891 = vld [vmem:[#allocation2 + $0x58] sm:$0xff]
    %v892 = vld [vmem:[#allocation2 + $0x68] sm:$0xff]
    %v893 = vld [vmem:[#allocation2 + $0x78] sm:$0xff]
    %v894 = vld [vmem:[#allocation2 + $0x88] sm:$0xff]
    %v895 = vld [vmem:[#allocation2 + $0x98] sm:$0xff]
    %v896 = vld [vmem:[#allocation2 + $0xa8] sm:$0xff]
    %v897 = vld [vmem:[#allocation2 + $0xb8] sm:$0xff]
    %v898 = vld [vmem:[#allocation2 + $0xc8] sm:$0xff]
    %v899 = vld [vmem:[#allocation2 + $0xd8] sm:$0xff]
    %v900 = vld [vmem:[#allocation2 + $0xe8] sm:$0xff]
    %v901 = vld [vmem:[#allocation2 + $0xf8] sm:$0xff]
    %902 = vmatpush.msra.mxu0 %v901
    %903 = vmatpush.msra.mxu0 %v900
    %904 = vmatpush.msra.mxu0 %v899
    %905 = vmatpush.msra.mxu0 %v898
    %906 = vmatpush.msra.mxu0 %v897
    %907 = vmatpush.msra.mxu0 %v896
    %908 = vmatpush.msra.mxu0 %v895
    %909 = vmatpush.msra.mxu0 %v894
    %910 = vmatpush.msra.mxu0 %v893
    %911 = vmatpush.msra.mxu0 %v892
    %912 = vmatpush.msra.mxu0 %v891
    %913 = vmatpush.msra.mxu0 %v890
    %914 = vmatpush.msra.mxu0 %v889
    %915 = vmatpush.msra.mxu0 %v888
    %916 = vmatpush.msra.mxu0 %v887
    %917 = vmatpush.msra.mxu0 %v886
    %918 = vmatmul.f32.gmra.mxu0 %v387
    %v919 = vpop.f32.mrf.mxu0
    %v920 = vadd.f32 0.0, %v919
    %921 = vmatmul.f32.gmra.mxu0 %v388
    %v922 = vpop.f32.mrf.mxu0
    %v923 = vadd.f32 0.0, %v922
    %924 = vmatmul.f32.gmra.mxu0 %v389
    %v925 = vpop.f32.mrf.mxu0
    %v926 = vadd.f32 0.0, %v925
    %927 = vmatmul.f32.gmra.mxu0 %v390
    %v928 = vpop.f32.mrf.mxu0
    %v929 = vadd.f32 0.0, %v928
    %930 = vmatmul.f32.gmra.mxu0 %v391
    %v931 = vpop.f32.mrf.mxu0
    %v932 = vadd.f32 0.0, %v931
    %933 = vmatmul.f32.gmra.mxu0 %v392
    %v934 = vpop.f32.mrf.mxu0
    %v935 = vadd.f32 0.0, %v934
    %936 = vmatmul.f32.gmra.mxu0 %v393
    %v937 = vpop.f32.mrf.mxu0
    %v938 = vadd.f32 0.0, %v937
    %939 = vmatmul.f32.gmra.mxu0 %v394
    %v940 = vpop.f32.mrf.mxu0
    %v941 = vadd.f32 0.0, %v940
    %942 = vmatmul.f32.gmra.mxu0 %v395
    %v943 = vpop.f32.mrf.mxu0
    %v944 = vadd.f32 0.0, %v943
    %945 = vmatmul.f32.gmra.mxu0 %v396
    %v946 = vpop.f32.mrf.mxu0
    %v947 = vadd.f32 0.0, %v946
    %948 = vmatmul.f32.gmra.mxu0 %v397
    %v949 = vpop.f32.mrf.mxu0
    %v950 = vadd.f32 0.0, %v949
    %951 = vmatmul.f32.gmra.mxu0 %v398
    %v952 = vpop.f32.mrf.mxu0
    %v953 = vadd.f32 0.0, %v952
    %954 = vmatmul.f32.gmra.mxu0 %v399
    %v955 = vpop.f32.mrf.mxu0
    %v956 = vadd.f32 0.0, %v955
    %957 = vmatmul.f32.gmra.mxu0 %v400
    %v958 = vpop.f32.mrf.mxu0
    %v959 = vadd.f32 0.0, %v958
    %960 = vmatmul.f32.gmra.mxu0 %v401
    %v961 = vpop.f32.mrf.mxu0
    %v962 = vadd.f32 0.0, %v961
    %963 = vmatmul.f32.gmra.mxu0 %v402
    %v964 = vpop.f32.mrf.mxu0
    %v965 = vadd.f32 0.0, %v964
    %966 = vdwg.mxu0
    %967 = vst [vmem:[#allocation2] sm:$0xff] %v920
    %968 = vst [vmem:[#allocation2 + $0x10] sm:$0xff] %v923
    %969 = vst [vmem:[#allocation2 + $0x20] sm:$0xff] %v926
    %970 = vst [vmem:[#allocation2 + $0x30] sm:$0xff] %v929
    %971 = vst [vmem:[#allocation2 + $0x40] sm:$0xff] %v932
    %972 = vst [vmem:[#allocation2 + $0x50] sm:$0xff] %v935
    %973 = vst [vmem:[#allocation2 + $0x60] sm:$0xff] %v938
    %974 = vst [vmem:[#allocation2 + $0x70] sm:$0xff] %v941
    %975 = vst [vmem:[#allocation2 + $0x80] sm:$0xff] %v944
    %976 = vst [vmem:[#allocation2 + $0x90] sm:$0xff] %v947
    %977 = vst [vmem:[#allocation2 + $0xa0] sm:$0xff] %v950
    %978 = vst [vmem:[#allocation2 + $0xb0] sm:$0xff] %v953
    %979 = vst [vmem:[#allocation2 + $0xc0] sm:$0xff] %v956
    %980 = vst [vmem:[#allocation2 + $0xd0] sm:$0xff] %v959
    %981 = vst [vmem:[#allocation2 + $0xe0] sm:$0xff] %v962
    %982 = vst [vmem:[#allocation2 + $0xf0] sm:$0xff] %v965
    %v983 = vld [vmem:[#allocation2] sm:$0xff]
    %v984 = vld [vmem:[#allocation2 + $0x8] sm:$0xff]
    %v985 = vld [vmem:[#allocation2 + $0x10] sm:$0xff]
    %v986 = vld [vmem:[#allocation2 + $0x18] sm:$0xff]
    %v987 = vld [vmem:[#allocation2 + $0x20] sm:$0xff]
    %v988 = vld [vmem:[#allocation2 + $0x28] sm:$0xff]
    %v989 = vld [vmem:[#allocation2 + $0x30] sm:$0xff]
    %v990 = vld [vmem:[#allocation2 + $0x38] sm:$0xff]
    %v991 = vld [vmem:[#allocation2 + $0x40] sm:$0xff]
    %v992 = vld [vmem:[#allocation2 + $0x48] sm:$0xff]
    %v993 = vld [vmem:[#allocation2 + $0x50] sm:$0xff]
    %v994 = vld [vmem:[#allocation2 + $0x58] sm:$0xff]
    %v995 = vld [vmem:[#allocation2 + $0x60] sm:$0xff]
    %v996 = vld [vmem:[#allocation2 + $0x68] sm:$0xff]
    %v997 = vld [vmem:[#allocation2 + $0x70] sm:$0xff]
    %v998 = vld [vmem:[#allocation2 + $0x78] sm:$0xff]
    %v999 = vld [vmem:[#allocation2 + $0x80] sm:$0xff]
    %v1000 = vld [vmem:[#allocation2 + $0x88] sm:$0xff]
    %v1001 = vld [vmem:[#allocation2 + $0x90] sm:$0xff]
    %v1002 = vld [vmem:[#allocation2 + $0x98] sm:$0xff]
    %v1003 = vld [vmem:[#allocation2 + $0xa0] sm:$0xff]
    %v1004 = vld [vmem:[#allocation2 + $0xa8] sm:$0xff]
    %v1005 = vld [vmem:[#allocation2 + $0xb0] sm:$0xff]
    %v1006 = vld [vmem:[#allocation2 + $0xb8] sm:$0xff]
    %v1007 = vld [vmem:[#allocation2 + $0xc0] sm:$0xff]
    %v1008 = vld [vmem:[#allocation2 + $0xc8] sm:$0xff]
    %v1009 = vld [vmem:[#allocation2 + $0xd0] sm:$0xff]
    %v1010 = vld [vmem:[#allocation2 + $0xd8] sm:$0xff]
    %v1011 = vld [vmem:[#allocation2 + $0xe0] sm:$0xff]
    %v1012 = vld [vmem:[#allocation2 + $0xe8] sm:$0xff]
    %v1013 = vld [vmem:[#allocation2 + $0xf0] sm:$0xff]
    %v1014 = vld [vmem:[#allocation2 + $0xf8] sm:$0xff]
    %s1015 = scalar_lea.vmem [#allocation3], 256
    %v1016 = vld [vmem:[%s1015] sm:$0xff]
    %v1017 = vld [vmem:[%s1015 + $0x8] sm:$0xff]
    %v1018 = vld [vmem:[%s1015 + $0x10] sm:$0xff]
    %v1019 = vld [vmem:[%s1015 + $0x18] sm:$0xff]
    %v1020 = vld [vmem:[%s1015 + $0x20] sm:$0xff]
    %v1021 = vld [vmem:[%s1015 + $0x28] sm:$0xff]
    %v1022 = vld [vmem:[%s1015 + $0x30] sm:$0xff]
    %v1023 = vld [vmem:[%s1015 + $0x38] sm:$0xff]
    %v1024 = vld [vmem:[%s1015 + $0x40] sm:$0xff]
    %v1025 = vld [vmem:[%s1015 + $0x48] sm:$0xff]
    %v1026 = vld [vmem:[%s1015 + $0x50] sm:$0xff]
    %v1027 = vld [vmem:[%s1015 + $0x58] sm:$0xff]
    %v1028 = vld [vmem:[%s1015 + $0x60] sm:$0xff]
    %v1029 = vld [vmem:[%s1015 + $0x68] sm:$0xff]
    %v1030 = vld [vmem:[%s1015 + $0x70] sm:$0xff]
    %v1031 = vld [vmem:[%s1015 + $0x78] sm:$0xff]
    %v1032 = vld [vmem:[%s1015 + $0x80] sm:$0xff]
    %v1033 = vld [vmem:[%s1015 + $0x88] sm:$0xff]
    %v1034 = vld [vmem:[%s1015 + $0x90] sm:$0xff]
    %v1035 = vld [vmem:[%s1015 + $0x98] sm:$0xff]
    %v1036 = vld [vmem:[%s1015 + $0xa0] sm:$0xff]
    %v1037 = vld [vmem:[%s1015 + $0xa8] sm:$0xff]
    %v1038 = vld [vmem:[%s1015 + $0xb0] sm:$0xff]
    %v1039 = vld [vmem:[%s1015 + $0xb8] sm:$0xff]
    %v1040 = vld [vmem:[%s1015 + $0xc0] sm:$0xff]
    %v1041 = vld [vmem:[%s1015 + $0xc8] sm:$0xff]
    %v1042 = vld [vmem:[%s1015 + $0xd0] sm:$0xff]
    %v1043 = vld [vmem:[%s1015 + $0xd8] sm:$0xff]
    %v1044 = vld [vmem:[%s1015 + $0xe0] sm:$0xff]
    %v1045 = vld [vmem:[%s1015 + $0xe8] sm:$0xff]
    %v1046 = vld [vmem:[%s1015 + $0xf0] sm:$0xff]
    %v1047 = vld [vmem:[%s1015 + $0xf8] sm:$0xff]
    %s1048 = scalar_lea.vmem [#allocation5], 1
    %v1049 = vld [vmem:[%s1048] sm:$0x1]
    %v1051 = vperm.slane %v1049, 0
    %1053 = vmatpush.msra.mxu0 %v1031
    %1054 = vmatpush.msra.mxu0 %v1030
    %1055 = vmatpush.msra.mxu0 %v1029
    %1056 = vmatpush.msra.mxu0 %v1028
    %1057 = vmatpush.msra.mxu0 %v1027
    %1058 = vmatpush.msra.mxu0 %v1026
    %1059 = vmatpush.msra.mxu0 %v1025
    %1060 = vmatpush.msra.mxu0 %v1024
    %1061 = vmatpush.msra.mxu0 %v1023
    %1062 = vmatpush.msra.mxu0 %v1022
    %1063 = vmatpush.msra.mxu0 %v1021
    %1064 = vmatpush.msra.mxu0 %v1020
    %1065 = vmatpush.msra.mxu0 %v1019
    %1066 = vmatpush.msra.mxu0 %v1018
    %1067 = vmatpush.msra.mxu0 %v1017
    %1068 = vmatpush.msra.mxu0 %v1016
    %1069 = vmatmul.f32.gmra.mxu0 %v983
    %v1070 = vpop.f32.mrf.mxu0
    %v1071 = vadd.f32 %v1051, %v1070
    %1072 = vmatmul.f32.gmra.mxu0 %v985
    %v1073 = vpop.f32.mrf.mxu0
    %v1074 = vadd.f32 %v1051, %v1073
    %1075 = vmatmul.f32.gmra.mxu0 %v987
    %v1076 = vpop.f32.mrf.mxu0
    %v1077 = vadd.f32 %v1051, %v1076
    %1078 = vmatmul.f32.gmra.mxu0 %v989
    %v1079 = vpop.f32.mrf.mxu0
    %v1080 = vadd.f32 %v1051, %v1079
    %1081 = vmatmul.f32.gmra.mxu0 %v991
    %v1082 = vpop.f32.mrf.mxu0
    %v1083 = vadd.f32 %v1051, %v1082
    %1084 = vmatmul.f32.gmra.mxu0 %v993
    %v1085 = vpop.f32.mrf.mxu0
    %v1086 = vadd.f32 %v1051, %v1085
    %1087 = vmatmul.f32.gmra.mxu0 %v995
    %v1088 = vpop.f32.mrf.mxu0
    %v1089 = vadd.f32 %v1051, %v1088
    %1090 = vmatmul.f32.gmra.mxu0 %v997
    %v1091 = vpop.f32.mrf.mxu0
    %v1092 = vadd.f32 %v1051, %v1091
    %1093 = vmatmul.f32.gmra.mxu0 %v999
    %v1094 = vpop.f32.mrf.mxu0
    %v1095 = vadd.f32 %v1051, %v1094
    %1096 = vmatmul.f32.gmra.mxu0 %v1001
    %v1097 = vpop.f32.mrf.mxu0
    %v1098 = vadd.f32 %v1051, %v1097
    %1099 = vmatmul.f32.gmra.mxu0 %v1003
    %v1100 = vpop.f32.mrf.mxu0
    %v1101 = vadd.f32 %v1051, %v1100
    %1102 = vmatmul.f32.gmra.mxu0 %v1005
    %v1103 = vpop.f32.mrf.mxu0
    %v1104 = vadd.f32 %v1051, %v1103
    %1105 = vmatmul.f32.gmra.mxu0 %v1007
    %v1106 = vpop.f32.mrf.mxu0
    %v1107 = vadd.f32 %v1051, %v1106
    %1108 = vmatmul.f32.gmra.mxu0 %v1009
    %v1109 = vpop.f32.mrf.mxu0
    %v1110 = vadd.f32 %v1051, %v1109
    %1111 = vmatmul.f32.gmra.mxu0 %v1011
    %v1112 = vpop.f32.mrf.mxu0
    %v1113 = vadd.f32 %v1051, %v1112
    %1114 = vmatmul.f32.gmra.mxu0 %v1013
    %v1115 = vpop.f32.mrf.mxu0
    %v1116 = vadd.f32 %v1051, %v1115
    %1117 = vdwg.mxu0
    %1118 = vmatpush.msra.mxu0 %v1047
    %1119 = vmatpush.msra.mxu0 %v1046
    %1120 = vmatpush.msra.mxu0 %v1045
    %1121 = vmatpush.msra.mxu0 %v1044
    %1122 = vmatpush.msra.mxu0 %v1043
    %1123 = vmatpush.msra.mxu0 %v1042
    %1124 = vmatpush.msra.mxu0 %v1041
    %1125 = vmatpush.msra.mxu0 %v1040
    %1126 = vmatpush.msra.mxu0 %v1039
    %1127 = vmatpush.msra.mxu0 %v1038
    %1128 = vmatpush.msra.mxu0 %v1037
    %1129 = vmatpush.msra.mxu0 %v1036
    %1130 = vmatpush.msra.mxu0 %v1035
    %1131 = vmatpush.msra.mxu0 %v1034
    %1132 = vmatpush.msra.mxu0 %v1033
    %1133 = vmatpush.msra.mxu0 %v1032
    %1134 = vmatmul.f32.gmra.mxu0 %v984
    %v1135 = vpop.f32.mrf.mxu0
    %v1136 = vadd.f32 %v1071, %v1135
    %1137 = vmatmul.f32.gmra.mxu0 %v986
    %v1138 = vpop.f32.mrf.mxu0
    %v1139 = vadd.f32 %v1074, %v1138
    %1140 = vmatmul.f32.gmra.mxu0 %v988
    %v1141 = vpop.f32.mrf.mxu0
    %v1142 = vadd.f32 %v1077, %v1141
    %1143 = vmatmul.f32.gmra.mxu0 %v990
    %v1144 = vpop.f32.mrf.mxu0
    %v1145 = vadd.f32 %v1080, %v1144
    %1146 = vmatmul.f32.gmra.mxu0 %v992
    %v1147 = vpop.f32.mrf.mxu0
    %v1148 = vadd.f32 %v1083, %v1147
    %1149 = vmatmul.f32.gmra.mxu0 %v994
    %v1150 = vpop.f32.mrf.mxu0
    %v1151 = vadd.f32 %v1086, %v1150
    %1152 = vmatmul.f32.gmra.mxu0 %v996
    %v1153 = vpop.f32.mrf.mxu0
    %v1154 = vadd.f32 %v1089, %v1153
    %1155 = vmatmul.f32.gmra.mxu0 %v998
    %v1156 = vpop.f32.mrf.mxu0
    %v1157 = vadd.f32 %v1092, %v1156
    %1158 = vmatmul.f32.gmra.mxu0 %v1000
    %v1159 = vpop.f32.mrf.mxu0
    %v1160 = vadd.f32 %v1095, %v1159
    %1161 = vmatmul.f32.gmra.mxu0 %v1002
    %v1162 = vpop.f32.mrf.mxu0
    %v1163 = vadd.f32 %v1098, %v1162
    %1164 = vmatmul.f32.gmra.mxu0 %v1004
    %v1165 = vpop.f32.mrf.mxu0
    %v1166 = vadd.f32 %v1101, %v1165
    %1167 = vmatmul.f32.gmra.mxu0 %v1006
    %v1168 = vpop.f32.mrf.mxu0
    %v1169 = vadd.f32 %v1104, %v1168
    %1170 = vmatmul.f32.gmra.mxu0 %v1008
    %v1171 = vpop.f32.mrf.mxu0
    %v1172 = vadd.f32 %v1107, %v1171
    %1173 = vmatmul.f32.gmra.mxu0 %v1010
    %v1174 = vpop.f32.mrf.mxu0
    %v1175 = vadd.f32 %v1110, %v1174
    %1176 = vmatmul.f32.gmra.mxu0 %v1012
    %v1177 = vpop.f32.mrf.mxu0
    %v1178 = vadd.f32 %v1113, %v1177
    %1179 = vmatmul.f32.gmra.mxu0 %v1014
    %v1180 = vpop.f32.mrf.mxu0
    %v1181 = vadd.f32 %v1116, %v1180
    %1182 = vdwg.mxu0
    %v1183 = vmax.f32 %v1136, 0.0
    %v1184 = vmax.f32 %v1139, 0.0
    %v1185 = vmax.f32 %v1142, 0.0
    %v1186 = vmax.f32 %v1145, 0.0
    %v1187 = vmax.f32 %v1148, 0.0
    %v1188 = vmax.f32 %v1151, 0.0
    %v1189 = vmax.f32 %v1154, 0.0
    %v1190 = vmax.f32 %v1157, 0.0
    %v1191 = vmax.f32 %v1160, 0.0
    %v1192 = vmax.f32 %v1163, 0.0
    %v1193 = vmax.f32 %v1166, 0.0
    %v1194 = vmax.f32 %v1169, 0.0
    %v1195 = vmax.f32 %v1172, 0.0
    %v1196 = vmax.f32 %v1175, 0.0
    %v1197 = vmax.f32 %v1178, 0.0
    %v1198 = vmax.f32 %v1181, 0.0
    %1199 = vst [vmem:[#allocation2 + $0x8] sm:$0xff] %v1183
    %1200 = vst [vmem:[#allocation2 + $0x18] sm:$0xff] %v1184
    %1201 = vst [vmem:[#allocation2 + $0x28] sm:$0xff] %v1185
    %1202 = vst [vmem:[#allocation2 + $0x38] sm:$0xff] %v1186
    %1203 = vst [vmem:[#allocation2 + $0x48] sm:$0xff] %v1187
    %1204 = vst [vmem:[#allocation2 + $0x58] sm:$0xff] %v1188
    %1205 = vst [vmem:[#allocation2 + $0x68] sm:$0xff] %v1189
    %1206 = vst [vmem:[#allocation2 + $0x78] sm:$0xff] %v1190
    %1207 = vst [vmem:[#allocation2 + $0x88] sm:$0xff] %v1191
    %1208 = vst [vmem:[#allocation2 + $0x98] sm:$0xff] %v1192
    %1209 = vst [vmem:[#allocation2 + $0xa8] sm:$0xff] %v1193
    %1210 = vst [vmem:[#allocation2 + $0xb8] sm:$0xff] %v1194
    %1211 = vst [vmem:[#allocation2 + $0xc8] sm:$0xff] %v1195
    %1212 = vst [vmem:[#allocation2 + $0xd8] sm:$0xff] %v1196
    %1213 = vst [vmem:[#allocation2 + $0xe8] sm:$0xff] %v1197
    %1214 = vst [vmem:[#allocation2 + $0xf8] sm:$0xff] %v1198
    %v1215 = vld [vmem:[#allocation2 + $0x8] sm:$0xff]
    %v1216 = vld [vmem:[#allocation2 + $0x18] sm:$0xff]
    %v1217 = vld [vmem:[#allocation2 + $0x28] sm:$0xff]
    %v1218 = vld [vmem:[#allocation2 + $0x38] sm:$0xff]
    %v1219 = vld [vmem:[#allocation2 + $0x48] sm:$0xff]
    %v1220 = vld [vmem:[#allocation2 + $0x58] sm:$0xff]
    %v1221 = vld [vmem:[#allocation2 + $0x68] sm:$0xff]
    %v1222 = vld [vmem:[#allocation2 + $0x78] sm:$0xff]
    %v1223 = vld [vmem:[#allocation2 + $0x88] sm:$0xff]
    %v1224 = vld [vmem:[#allocation2 + $0x98] sm:$0xff]
    %v1225 = vld [vmem:[#allocation2 + $0xa8] sm:$0xff]
    %v1226 = vld [vmem:[#allocation2 + $0xb8] sm:$0xff]
    %v1227 = vld [vmem:[#allocation2 + $0xc8] sm:$0xff]
    %v1228 = vld [vmem:[#allocation2 + $0xd8] sm:$0xff]
    %v1229 = vld [vmem:[#allocation2 + $0xe8] sm:$0xff]
    %v1230 = vld [vmem:[#allocation2 + $0xf8] sm:$0xff]
    %1231 = vmatpush.msra.mxu0 %v1230
    %1232 = vmatpush.msra.mxu0 %v1229
    %1233 = vmatpush.msra.mxu0 %v1228
    %1234 = vmatpush.msra.mxu0 %v1227
    %1235 = vmatpush.msra.mxu0 %v1226
    %1236 = vmatpush.msra.mxu0 %v1225
    %1237 = vmatpush.msra.mxu0 %v1224
    %1238 = vmatpush.msra.mxu0 %v1223
    %1239 = vmatpush.msra.mxu0 %v1222
    %1240 = vmatpush.msra.mxu0 %v1221
    %1241 = vmatpush.msra.mxu0 %v1220
    %1242 = vmatpush.msra.mxu0 %v1219
    %1243 = vmatpush.msra.mxu0 %v1218
    %1244 = vmatpush.msra.mxu0 %v1217
    %1245 = vmatpush.msra.mxu0 %v1216
    %1246 = vmatpush.msra.mxu0 %v1215
    %1247 = vmatmul.f32.gmra.mxu0 %v387
    %v1248 = vpop.f32.mrf.mxu0
    %v1249 = vadd.f32 0.0, %v1248
    %1250 = vmatmul.f32.gmra.mxu0 %v388
    %v1251 = vpop.f32.mrf.mxu0
    %v1252 = vadd.f32 0.0, %v1251
    %1253 = vmatmul.f32.gmra.mxu0 %v389
    %v1254 = vpop.f32.mrf.mxu0
    %v1255 = vadd.f32 0.0, %v1254
    %1256 = vmatmul.f32.gmra.mxu0 %v390
    %v1257 = vpop.f32.mrf.mxu0
    %v1258 = vadd.f32 0.0, %v1257
    %1259 = vmatmul.f32.gmra.mxu0 %v391
    %v1260 = vpop.f32.mrf.mxu0
    %v1261 = vadd.f32 0.0, %v1260
    %1262 = vmatmul.f32.gmra.mxu0 %v392
    %v1263 = vpop.f32.mrf.mxu0
    %v1264 = vadd.f32 0.0, %v1263
    %1265 = vmatmul.f32.gmra.mxu0 %v393
    %v1266 = vpop.f32.mrf.mxu0
    %v1267 = vadd.f32 0.0, %v1266
    %1268 = vmatmul.f32.gmra.mxu0 %v394
    %v1269 = vpop.f32.mrf.mxu0
    %v1270 = vadd.f32 0.0, %v1269
    %1271 = vmatmul.f32.gmra.mxu0 %v395
    %v1272 = vpop.f32.mrf.mxu0
    %v1273 = vadd.f32 0.0, %v1272
    %1274 = vmatmul.f32.gmra.mxu0 %v396
    %v1275 = vpop.f32.mrf.mxu0
    %v1276 = vadd.f32 0.0, %v1275
    %1277 = vmatmul.f32.gmra.mxu0 %v397
    %v1278 = vpop.f32.mrf.mxu0
    %v1279 = vadd.f32 0.0, %v1278
    %1280 = vmatmul.f32.gmra.mxu0 %v398
    %v1281 = vpop.f32.mrf.mxu0
    %v1282 = vadd.f32 0.0, %v1281
    %1283 = vmatmul.f32.gmra.mxu0 %v399
    %v1284 = vpop.f32.mrf.mxu0
    %v1285 = vadd.f32 0.0, %v1284
    %1286 = vmatmul.f32.gmra.mxu0 %v400
    %v1287 = vpop.f32.mrf.mxu0
    %v1288 = vadd.f32 0.0, %v1287
    %1289 = vmatmul.f32.gmra.mxu0 %v401
    %v1290 = vpop.f32.mrf.mxu0
    %v1291 = vadd.f32 0.0, %v1290
    %1292 = vmatmul.f32.gmra.mxu0 %v402
    %v1293 = vpop.f32.mrf.mxu0
    %v1294 = vadd.f32 0.0, %v1293
    %1295 = vdwg.mxu0
    %1296 = vst [vmem:[#allocation2] sm:$0xff] %v1249
    %1297 = vst [vmem:[#allocation2 + $0x10] sm:$0xff] %v1252
    %1298 = vst [vmem:[#allocation2 + $0x20] sm:$0xff] %v1255
    %1299 = vst [vmem:[#allocation2 + $0x30] sm:$0xff] %v1258
    %1300 = vst [vmem:[#allocation2 + $0x40] sm:$0xff] %v1261
    %1301 = vst [vmem:[#allocation2 + $0x50] sm:$0xff] %v1264
    %1302 = vst [vmem:[#allocation2 + $0x60] sm:$0xff] %v1267
    %1303 = vst [vmem:[#allocation2 + $0x70] sm:$0xff] %v1270
    %1304 = vst [vmem:[#allocation2 + $0x80] sm:$0xff] %v1273
    %1305 = vst [vmem:[#allocation2 + $0x90] sm:$0xff] %v1276
    %1306 = vst [vmem:[#allocation2 + $0xa0] sm:$0xff] %v1279
    %1307 = vst [vmem:[#allocation2 + $0xb0] sm:$0xff] %v1282
    %1308 = vst [vmem:[#allocation2 + $0xc0] sm:$0xff] %v1285
    %1309 = vst [vmem:[#allocation2 + $0xd0] sm:$0xff] %v1288
    %1310 = vst [vmem:[#allocation2 + $0xe0] sm:$0xff] %v1291
    %1311 = vst [vmem:[#allocation2 + $0xf0] sm:$0xff] %v1294
    %v1312 = vld [vmem:[#allocation2] sm:$0xff]
    %v1313 = vld [vmem:[#allocation2 + $0x8] sm:$0xff]
    %v1314 = vld [vmem:[#allocation2 + $0x10] sm:$0xff]
    %v1315 = vld [vmem:[#allocation2 + $0x18] sm:$0xff]
    %v1316 = vld [vmem:[#allocation2 + $0x20] sm:$0xff]
    %v1317 = vld [vmem:[#allocation2 + $0x28] sm:$0xff]
    %v1318 = vld [vmem:[#allocation2 + $0x30] sm:$0xff]
    %v1319 = vld [vmem:[#allocation2 + $0x38] sm:$0xff]
    %v1320 = vld [vmem:[#allocation2 + $0x40] sm:$0xff]
    %v1321 = vld [vmem:[#allocation2 + $0x48] sm:$0xff]
    %v1322 = vld [vmem:[#allocation2 + $0x50] sm:$0xff]
    %v1323 = vld [vmem:[#allocation2 + $0x58] sm:$0xff]
    %v1324 = vld [vmem:[#allocation2 + $0x60] sm:$0xff]
    %v1325 = vld [vmem:[#allocation2 + $0x68] sm:$0xff]
    %v1326 = vld [vmem:[#allocation2 + $0x70] sm:$0xff]
    %v1327 = vld [vmem:[#allocation2 + $0x78] sm:$0xff]
    %v1328 = vld [vmem:[#allocation2 + $0x80] sm:$0xff]
    %v1329 = vld [vmem:[#allocation2 + $0x88] sm:$0xff]
    %v1330 = vld [vmem:[#allocation2 + $0x90] sm:$0xff]
    %v1331 = vld [vmem:[#allocation2 + $0x98] sm:$0xff]
    %v1332 = vld [vmem:[#allocation2 + $0xa0] sm:$0xff]
    %v1333 = vld [vmem:[#allocation2 + $0xa8] sm:$0xff]
    %v1334 = vld [vmem:[#allocation2 + $0xb0] sm:$0xff]
    %v1335 = vld [vmem:[#allocation2 + $0xb8] sm:$0xff]
    %v1336 = vld [vmem:[#allocation2 + $0xc0] sm:$0xff]
    %v1337 = vld [vmem:[#allocation2 + $0xc8] sm:$0xff]
    %v1338 = vld [vmem:[#allocation2 + $0xd0] sm:$0xff]
    %v1339 = vld [vmem:[#allocation2 + $0xd8] sm:$0xff]
    %v1340 = vld [vmem:[#allocation2 + $0xe0] sm:$0xff]
    %v1341 = vld [vmem:[#allocation2 + $0xe8] sm:$0xff]
    %v1342 = vld [vmem:[#allocation2 + $0xf0] sm:$0xff]
    %v1343 = vld [vmem:[#allocation2 + $0xf8] sm:$0xff]
    %s1344 = scalar_lea.vmem [#allocation3], 512
    %v1345 = vld [vmem:[%s1344] sm:$0xff]
    %v1346 = vld [vmem:[%s1344 + $0x8] sm:$0xff]
    %v1347 = vld [vmem:[%s1344 + $0x10] sm:$0xff]
    %v1348 = vld [vmem:[%s1344 + $0x18] sm:$0xff]
    %v1349 = vld [vmem:[%s1344 + $0x20] sm:$0xff]
    %v1350 = vld [vmem:[%s1344 + $0x28] sm:$0xff]
    %v1351 = vld [vmem:[%s1344 + $0x30] sm:$0xff]
    %v1352 = vld [vmem:[%s1344 + $0x38] sm:$0xff]
    %v1353 = vld [vmem:[%s1344 + $0x40] sm:$0xff]
    %v1354 = vld [vmem:[%s1344 + $0x48] sm:$0xff]
    %v1355 = vld [vmem:[%s1344 + $0x50] sm:$0xff]
    %v1356 = vld [vmem:[%s1344 + $0x58] sm:$0xff]
    %v1357 = vld [vmem:[%s1344 + $0x60] sm:$0xff]
    %v1358 = vld [vmem:[%s1344 + $0x68] sm:$0xff]
    %v1359 = vld [vmem:[%s1344 + $0x70] sm:$0xff]
    %v1360 = vld [vmem:[%s1344 + $0x78] sm:$0xff]
    %v1361 = vld [vmem:[%s1344 + $0x80] sm:$0xff]
    %v1362 = vld [vmem:[%s1344 + $0x88] sm:$0xff]
    %v1363 = vld [vmem:[%s1344 + $0x90] sm:$0xff]
    %v1364 = vld [vmem:[%s1344 + $0x98] sm:$0xff]
    %v1365 = vld [vmem:[%s1344 + $0xa0] sm:$0xff]
    %v1366 = vld [vmem:[%s1344 + $0xa8] sm:$0xff]
    %v1367 = vld [vmem:[%s1344 + $0xb0] sm:$0xff]
    %v1368 = vld [vmem:[%s1344 + $0xb8] sm:$0xff]
    %v1369 = vld [vmem:[%s1344 + $0xc0] sm:$0xff]
    %v1370 = vld [vmem:[%s1344 + $0xc8] sm:$0xff]
    %v1371 = vld [vmem:[%s1344 + $0xd0] sm:$0xff]
    %v1372 = vld [vmem:[%s1344 + $0xd8] sm:$0xff]
    %v1373 = vld [vmem:[%s1344 + $0xe0] sm:$0xff]
    %v1374 = vld [vmem:[%s1344 + $0xe8] sm:$0xff]
    %v1375 = vld [vmem:[%s1344 + $0xf0] sm:$0xff]
    %v1376 = vld [vmem:[%s1344 + $0xf8] sm:$0xff]
    %s1377 = scalar_lea.vmem [#allocation5], 2
    %v1378 = vld [vmem:[%s1377] sm:$0x1]
    %v1380 = vperm.slane %v1378, 0
    %1382 = vmatpush.msra.mxu0 %v1360
    %1383 = vmatpush.msra.mxu0 %v1359
    %1384 = vmatpush.msra.mxu0 %v1358
    %1385 = vmatpush.msra.mxu0 %v1357
    %1386 = vmatpush.msra.mxu0 %v1356
    %1387 = vmatpush.msra.mxu0 %v1355
    %1388 = vmatpush.msra.mxu0 %v1354
    %1389 = vmatpush.msra.mxu0 %v1353
    %1390 = vmatpush.msra.mxu0 %v1352
    %1391 = vmatpush.msra.mxu0 %v1351
    %1392 = vmatpush.msra.mxu0 %v1350
    %1393 = vmatpush.msra.mxu0 %v1349
    %1394 = vmatpush.msra.mxu0 %v1348
    %1395 = vmatpush.msra.mxu0 %v1347
    %1396 = vmatpush.msra.mxu0 %v1346
    %1397 = vmatpush.msra.mxu0 %v1345
    %1398 = vmatmul.f32.gmra.mxu0 %v1312
    %v1399 = vpop.f32.mrf.mxu0
    %v1400 = vadd.f32 %v1380, %v1399
    %1401 = vmatmul.f32.gmra.mxu0 %v1314
    %v1402 = vpop.f32.mrf.mxu0
    %v1403 = vadd.f32 %v1380, %v1402
    %1404 = vmatmul.f32.gmra.mxu0 %v1316
    %v1405 = vpop.f32.mrf.mxu0
    %v1406 = vadd.f32 %v1380, %v1405
    %1407 = vmatmul.f32.gmra.mxu0 %v1318
    %v1408 = vpop.f32.mrf.mxu0
    %v1409 = vadd.f32 %v1380, %v1408
    %1410 = vmatmul.f32.gmra.mxu0 %v1320
    %v1411 = vpop.f32.mrf.mxu0
    %v1412 = vadd.f32 %v1380, %v1411
    %1413 = vmatmul.f32.gmra.mxu0 %v1322
    %v1414 = vpop.f32.mrf.mxu0
    %v1415 = vadd.f32 %v1380, %v1414
    %1416 = vmatmul.f32.gmra.mxu0 %v1324
    %v1417 = vpop.f32.mrf.mxu0
    %v1418 = vadd.f32 %v1380, %v1417
    %1419 = vmatmul.f32.gmra.mxu0 %v1326
    %v1420 = vpop.f32.mrf.mxu0
    %v1421 = vadd.f32 %v1380, %v1420
    %1422 = vmatmul.f32.gmra.mxu0 %v1328
    %v1423 = vpop.f32.mrf.mxu0
    %v1424 = vadd.f32 %v1380, %v1423
    %1425 = vmatmul.f32.gmra.mxu0 %v1330
    %v1426 = vpop.f32.mrf.mxu0
    %v1427 = vadd.f32 %v1380, %v1426
    %1428 = vmatmul.f32.gmra.mxu0 %v1332
    %v1429 = vpop.f32.mrf.mxu0
    %v1430 = vadd.f32 %v1380, %v1429
    %1431 = vmatmul.f32.gmra.mxu0 %v1334
    %v1432 = vpop.f32.mrf.mxu0
    %v1433 = vadd.f32 %v1380, %v1432
    %1434 = vmatmul.f32.gmra.mxu0 %v1336
    %v1435 = vpop.f32.mrf.mxu0
    %v1436 = vadd.f32 %v1380, %v1435
    %1437 = vmatmul.f32.gmra.mxu0 %v1338
    %v1438 = vpop.f32.mrf.mxu0
    %v1439 = vadd.f32 %v1380, %v1438
    %1440 = vmatmul.f32.gmra.mxu0 %v1340
    %v1441 = vpop.f32.mrf.mxu0
    %v1442 = vadd.f32 %v1380, %v1441
    %1443 = vmatmul.f32.gmra.mxu0 %v1342
    %v1444 = vpop.f32.mrf.mxu0
    %v1445 = vadd.f32 %v1380, %v1444
    %1446 = vdwg.mxu0
    %1447 = vmatpush.msra.mxu0 %v1376
    %1448 = vmatpush.msra.mxu0 %v1375
    %1449 = vmatpush.msra.mxu0 %v1374
    %1450 = vmatpush.msra.mxu0 %v1373
    %1451 = vmatpush.msra.mxu0 %v1372
    %1452 = vmatpush.msra.mxu0 %v1371
    %1453 = vmatpush.msra.mxu0 %v1370
    %1454 = vmatpush.msra.mxu0 %v1369
    %1455 = vmatpush.msra.mxu0 %v1368
    %1456 = vmatpush.msra.mxu0 %v1367
    %1457 = vmatpush.msra.mxu0 %v1366
    %1458 = vmatpush.msra.mxu0 %v1365
    %1459 = vmatpush.msra.mxu0 %v1364
    %1460 = vmatpush.msra.mxu0 %v1363
    %1461 = vmatpush.msra.mxu0 %v1362
    %1462 = vmatpush.msra.mxu0 %v1361
    %1463 = vmatmul.f32.gmra.mxu0 %v1313
    %v1464 = vpop.f32.mrf.mxu0
    %v1465 = vadd.f32 %v1400, %v1464
    %1466 = vmatmul.f32.gmra.mxu0 %v1315
    %v1467 = vpop.f32.mrf.mxu0
    %v1468 = vadd.f32 %v1403, %v1467
    %1469 = vmatmul.f32.gmra.mxu0 %v1317
    %v1470 = vpop.f32.mrf.mxu0
    %v1471 = vadd.f32 %v1406, %v1470
    %1472 = vmatmul.f32.gmra.mxu0 %v1319
    %v1473 = vpop.f32.mrf.mxu0
    %v1474 = vadd.f32 %v1409, %v1473
    %1475 = vmatmul.f32.gmra.mxu0 %v1321
    %v1476 = vpop.f32.mrf.mxu0
    %v1477 = vadd.f32 %v1412, %v1476
    %1478 = vmatmul.f32.gmra.mxu0 %v1323
    %v1479 = vpop.f32.mrf.mxu0
    %v1480 = vadd.f32 %v1415, %v1479
    %1481 = vmatmul.f32.gmra.mxu0 %v1325
    %v1482 = vpop.f32.mrf.mxu0
    %v1483 = vadd.f32 %v1418, %v1482
    %1484 = vmatmul.f32.gmra.mxu0 %v1327
    %v1485 = vpop.f32.mrf.mxu0
    %v1486 = vadd.f32 %v1421, %v1485
    %1487 = vmatmul.f32.gmra.mxu0 %v1329
    %v1488 = vpop.f32.mrf.mxu0
    %v1489 = vadd.f32 %v1424, %v1488
    %1490 = vmatmul.f32.gmra.mxu0 %v1331
    %v1491 = vpop.f32.mrf.mxu0
    %v1492 = vadd.f32 %v1427, %v1491
    %1493 = vmatmul.f32.gmra.mxu0 %v1333
    %v1494 = vpop.f32.mrf.mxu0
    %v1495 = vadd.f32 %v1430, %v1494
    %1496 = vmatmul.f32.gmra.mxu0 %v1335
    %v1497 = vpop.f32.mrf.mxu0
    %v1498 = vadd.f32 %v1433, %v1497
    %1499 = vmatmul.f32.gmra.mxu0 %v1337
    %v1500 = vpop.f32.mrf.mxu0
    %v1501 = vadd.f32 %v1436, %v1500
    %1502 = vmatmul.f32.gmra.mxu0 %v1339
    %v1503 = vpop.f32.mrf.mxu0
    %v1504 = vadd.f32 %v1439, %v1503
    %1505 = vmatmul.f32.gmra.mxu0 %v1341
    %v1506 = vpop.f32.mrf.mxu0
    %v1507 = vadd.f32 %v1442, %v1506
    %1508 = vmatmul.f32.gmra.mxu0 %v1343
    %v1509 = vpop.f32.mrf.mxu0
    %v1510 = vadd.f32 %v1445, %v1509
    %1511 = vdwg.mxu0
    %v1512 = vmax.f32 %v1465, 0.0
    %v1513 = vmax.f32 %v1468, 0.0
    %v1514 = vmax.f32 %v1471, 0.0
    %v1515 = vmax.f32 %v1474, 0.0
    %v1516 = vmax.f32 %v1477, 0.0
    %v1517 = vmax.f32 %v1480, 0.0
    %v1518 = vmax.f32 %v1483, 0.0
    %v1519 = vmax.f32 %v1486, 0.0
    %v1520 = vmax.f32 %v1489, 0.0
    %v1521 = vmax.f32 %v1492, 0.0
    %v1522 = vmax.f32 %v1495, 0.0
    %v1523 = vmax.f32 %v1498, 0.0
    %v1524 = vmax.f32 %v1501, 0.0
    %v1525 = vmax.f32 %v1504, 0.0
    %v1526 = vmax.f32 %v1507, 0.0
    %v1527 = vmax.f32 %v1510, 0.0
    %1528 = vst [vmem:[#allocation2 + $0x8] sm:$0xff] %v1512
    %1529 = vst [vmem:[#allocation2 + $0x18] sm:$0xff] %v1513
    %1530 = vst [vmem:[#allocation2 + $0x28] sm:$0xff] %v1514
    %1531 = vst [vmem:[#allocation2 + $0x38] sm:$0xff] %v1515
    %1532 = vst [vmem:[#allocation2 + $0x48] sm:$0xff] %v1516
    %1533 = vst [vmem:[#allocation2 + $0x58] sm:$0xff] %v1517
    %1534 = vst [vmem:[#allocation2 + $0x68] sm:$0xff] %v1518
    %1535 = vst [vmem:[#allocation2 + $0x78] sm:$0xff] %v1519
    %1536 = vst [vmem:[#allocation2 + $0x88] sm:$0xff] %v1520
    %1537 = vst [vmem:[#allocation2 + $0x98] sm:$0xff] %v1521
    %1538 = vst [vmem:[#allocation2 + $0xa8] sm:$0xff] %v1522
    %1539 = vst [vmem:[#allocation2 + $0xb8] sm:$0xff] %v1523
    %1540 = vst [vmem:[#allocation2 + $0xc8] sm:$0xff] %v1524
    %1541 = vst [vmem:[#allocation2 + $0xd8] sm:$0xff] %v1525
    %1542 = vst [vmem:[#allocation2 + $0xe8] sm:$0xff] %v1526
    %1543 = vst [vmem:[#allocation2 + $0xf8] sm:$0xff] %v1527
    %v1544 = vld [vmem:[#allocation2 + $0x8] sm:$0xff]
    %v1545 = vld [vmem:[#allocation2 + $0x18] sm:$0xff]
    %v1546 = vld [vmem:[#allocation2 + $0x28] sm:$0xff]
    %v1547 = vld [vmem:[#allocation2 + $0x38] sm:$0xff]
    %v1548 = vld [vmem:[#allocation2 + $0x48] sm:$0xff]
    %v1549 = vld [vmem:[#allocation2 + $0x58] sm:$0xff]
    %v1550 = vld [vmem:[#allocation2 + $0x68] sm:$0xff]
    %v1551 = vld [vmem:[#allocation2 + $0x78] sm:$0xff]
    %v1552 = vld [vmem:[#allocation2 + $0x88] sm:$0xff]
    %v1553 = vld [vmem:[#allocation2 + $0x98] sm:$0xff]
    %v1554 = vld [vmem:[#allocation2 + $0xa8] sm:$0xff]
    %v1555 = vld [vmem:[#allocation2 + $0xb8] sm:$0xff]
    %v1556 = vld [vmem:[#allocation2 + $0xc8] sm:$0xff]
    %v1557 = vld [vmem:[#allocation2 + $0xd8] sm:$0xff]
    %v1558 = vld [vmem:[#allocation2 + $0xe8] sm:$0xff]
    %v1559 = vld [vmem:[#allocation2 + $0xf8] sm:$0xff]
    %1560 = vmatpush.msra.mxu0 %v1559
    %1561 = vmatpush.msra.mxu0 %v1558
    %1562 = vmatpush.msra.mxu0 %v1557
    %1563 = vmatpush.msra.mxu0 %v1556
    %1564 = vmatpush.msra.mxu0 %v1555
    %1565 = vmatpush.msra.mxu0 %v1554
    %1566 = vmatpush.msra.mxu0 %v1553
    %1567 = vmatpush.msra.mxu0 %v1552
    %1568 = vmatpush.msra.mxu0 %v1551
    %1569 = vmatpush.msra.mxu0 %v1550
    %1570 = vmatpush.msra.mxu0 %v1549
    %1571 = vmatpush.msra.mxu0 %v1548
    %1572 = vmatpush.msra.mxu0 %v1547
    %1573 = vmatpush.msra.mxu0 %v1546
    %1574 = vmatpush.msra.mxu0 %v1545
    %1575 = vmatpush.msra.mxu0 %v1544
    %1576 = vmatmul.f32.gmra.mxu0 %v387
    %v1577 = vpop.f32.mrf.mxu0
    %v1578 = vadd.f32 0.0, %v1577
    %1579 = vmatmul.f32.gmra.mxu0 %v388
    %v1580 = vpop.f32.mrf.mxu0
    %v1581 = vadd.f32 0.0, %v1580
    %1582 = vmatmul.f32.gmra.mxu0 %v389
    %v1583 = vpop.f32.mrf.mxu0
    %v1584 = vadd.f32 0.0, %v1583
    %1585 = vmatmul.f32.gmra.mxu0 %v390
    %v1586 = vpop.f32.mrf.mxu0
    %v1587 = vadd.f32 0.0, %v1586
    %1588 = vmatmul.f32.gmra.mxu0 %v391
    %v1589 = vpop.f32.mrf.mxu0
    %v1590 = vadd.f32 0.0, %v1589
    %1591 = vmatmul.f32.gmra.mxu0 %v392
    %v1592 = vpop.f32.mrf.mxu0
    %v1593 = vadd.f32 0.0, %v1592
    %1594 = vmatmul.f32.gmra.mxu0 %v393
    %v1595 = vpop.f32.mrf.mxu0
    %v1596 = vadd.f32 0.0, %v1595
    %1597 = vmatmul.f32.gmra.mxu0 %v394
    %v1598 = vpop.f32.mrf.mxu0
    %v1599 = vadd.f32 0.0, %v1598
    %1600 = vmatmul.f32.gmra.mxu0 %v395
    %v1601 = vpop.f32.mrf.mxu0
    %v1602 = vadd.f32 0.0, %v1601
    %1603 = vmatmul.f32.gmra.mxu0 %v396
    %v1604 = vpop.f32.mrf.mxu0
    %v1605 = vadd.f32 0.0, %v1604
    %1606 = vmatmul.f32.gmra.mxu0 %v397
    %v1607 = vpop.f32.mrf.mxu0
    %v1608 = vadd.f32 0.0, %v1607
    %1609 = vmatmul.f32.gmra.mxu0 %v398
    %v1610 = vpop.f32.mrf.mxu0
    %v1611 = vadd.f32 0.0, %v1610
    %1612 = vmatmul.f32.gmra.mxu0 %v399
    %v1613 = vpop.f32.mrf.mxu0
    %v1614 = vadd.f32 0.0, %v1613
    %1615 = vmatmul.f32.gmra.mxu0 %v400
    %v1616 = vpop.f32.mrf.mxu0
    %v1617 = vadd.f32 0.0, %v1616
    %1618 = vmatmul.f32.gmra.mxu0 %v401
    %v1619 = vpop.f32.mrf.mxu0
    %v1620 = vadd.f32 0.0, %v1619
    %1621 = vmatmul.f32.gmra.mxu0 %v402
    %v1622 = vpop.f32.mrf.mxu0
    %v1623 = vadd.f32 0.0, %v1622
    %1624 = vdwg.mxu0
    %1625 = vst [vmem:[#allocation2] sm:$0xff] %v1578
    %1626 = vst [vmem:[#allocation2 + $0x10] sm:$0xff] %v1581
    %1627 = vst [vmem:[#allocation2 + $0x20] sm:$0xff] %v1584
    %1628 = vst [vmem:[#allocation2 + $0x30] sm:$0xff] %v1587
    %1629 = vst [vmem:[#allocation2 + $0x40] sm:$0xff] %v1590
    %1630 = vst [vmem:[#allocation2 + $0x50] sm:$0xff] %v1593
    %1631 = vst [vmem:[#allocation2 + $0x60] sm:$0xff] %v1596
    %1632 = vst [vmem:[#allocation2 + $0x70] sm:$0xff] %v1599
    %1633 = vst [vmem:[#allocation2 + $0x80] sm:$0xff] %v1602
    %1634 = vst [vmem:[#allocation2 + $0x90] sm:$0xff] %v1605
    %1635 = vst [vmem:[#allocation2 + $0xa0] sm:$0xff] %v1608
    %1636 = vst [vmem:[#allocation2 + $0xb0] sm:$0xff] %v1611
    %1637 = vst [vmem:[#allocation2 + $0xc0] sm:$0xff] %v1614
    %1638 = vst [vmem:[#allocation2 + $0xd0] sm:$0xff] %v1617
    %1639 = vst [vmem:[#allocation2 + $0xe0] sm:$0xff] %v1620
    %1640 = vst [vmem:[#allocation2 + $0xf0] sm:$0xff] %v1623
    %v1641 = vld [vmem:[#allocation2] sm:$0xff]
    %v1642 = vld [vmem:[#allocation2 + $0x8] sm:$0xff]
    %v1643 = vld [vmem:[#allocation2 + $0x10] sm:$0xff]
    %v1644 = vld [vmem:[#allocation2 + $0x18] sm:$0xff]
    %v1645 = vld [vmem:[#allocation2 + $0x20] sm:$0xff]
    %v1646 = vld [vmem:[#allocation2 + $0x28] sm:$0xff]
    %v1647 = vld [vmem:[#allocation2 + $0x30] sm:$0xff]
    %v1648 = vld [vmem:[#allocation2 + $0x38] sm:$0xff]
    %v1649 = vld [vmem:[#allocation2 + $0x40] sm:$0xff]
    %v1650 = vld [vmem:[#allocation2 + $0x48] sm:$0xff]
    %v1651 = vld [vmem:[#allocation2 + $0x50] sm:$0xff]
    %v1652 = vld [vmem:[#allocation2 + $0x58] sm:$0xff]
    %v1653 = vld [vmem:[#allocation2 + $0x60] sm:$0xff]
    %v1654 = vld [vmem:[#allocation2 + $0x68] sm:$0xff]
    %v1655 = vld [vmem:[#allocation2 + $0x70] sm:$0xff]
    %v1656 = vld [vmem:[#allocation2 + $0x78] sm:$0xff]
    %v1657 = vld [vmem:[#allocation2 + $0x80] sm:$0xff]
    %v1658 = vld [vmem:[#allocation2 + $0x88] sm:$0xff]
    %v1659 = vld [vmem:[#allocation2 + $0x90] sm:$0xff]
    %v1660 = vld [vmem:[#allocation2 + $0x98] sm:$0xff]
    %v1661 = vld [vmem:[#allocation2 + $0xa0] sm:$0xff]
    %v1662 = vld [vmem:[#allocation2 + $0xa8] sm:$0xff]
    %v1663 = vld [vmem:[#allocation2 + $0xb0] sm:$0xff]
    %v1664 = vld [vmem:[#allocation2 + $0xb8] sm:$0xff]
    %v1665 = vld [vmem:[#allocation2 + $0xc0] sm:$0xff]
    %v1666 = vld [vmem:[#allocation2 + $0xc8] sm:$0xff]
    %v1667 = vld [vmem:[#allocation2 + $0xd0] sm:$0xff]
    %v1668 = vld [vmem:[#allocation2 + $0xd8] sm:$0xff]
    %v1669 = vld [vmem:[#allocation2 + $0xe0] sm:$0xff]
    %v1670 = vld [vmem:[#allocation2 + $0xe8] sm:$0xff]
    %v1671 = vld [vmem:[#allocation2 + $0xf0] sm:$0xff]
    %v1672 = vld [vmem:[#allocation2 + $0xf8] sm:$0xff]
    %s1673 = scalar_lea.vmem [#allocation3], 768
    %v1674 = vld [vmem:[%s1673] sm:$0xff]
    %v1675 = vld [vmem:[%s1673 + $0x8] sm:$0xff]
    %v1676 = vld [vmem:[%s1673 + $0x10] sm:$0xff]
    %v1677 = vld [vmem:[%s1673 + $0x18] sm:$0xff]
    %v1678 = vld [vmem:[%s1673 + $0x20] sm:$0xff]
    %v1679 = vld [vmem:[%s1673 + $0x28] sm:$0xff]
    %v1680 = vld [vmem:[%s1673 + $0x30] sm:$0xff]
    %v1681 = vld [vmem:[%s1673 + $0x38] sm:$0xff]
    %v1682 = vld [vmem:[%s1673 + $0x40] sm:$0xff]
    %v1683 = vld [vmem:[%s1673 + $0x48] sm:$0xff]
    %v1684 = vld [vmem:[%s1673 + $0x50] sm:$0xff]
    %v1685 = vld [vmem:[%s1673 + $0x58] sm:$0xff]
    %v1686 = vld [vmem:[%s1673 + $0x60] sm:$0xff]
    %v1687 = vld [vmem:[%s1673 + $0x68] sm:$0xff]
    %v1688 = vld [vmem:[%s1673 + $0x70] sm:$0xff]
    %v1689 = vld [vmem:[%s1673 + $0x78] sm:$0xff]
    %v1690 = vld [vmem:[%s1673 + $0x80] sm:$0xff]
    %v1691 = vld [vmem:[%s1673 + $0x88] sm:$0xff]
    %v1692 = vld [vmem:[%s1673 + $0x90] sm:$0xff]
    %v1693 = vld [vmem:[%s1673 + $0x98] sm:$0xff]
    %v1694 = vld [vmem:[%s1673 + $0xa0] sm:$0xff]
    %v1695 = vld [vmem:[%s1673 + $0xa8] sm:$0xff]
    %v1696 = vld [vmem:[%s1673 + $0xb0] sm:$0xff]
    %v1697 = vld [vmem:[%s1673 + $0xb8] sm:$0xff]
    %v1698 = vld [vmem:[%s1673 + $0xc0] sm:$0xff]
    %v1699 = vld [vmem:[%s1673 + $0xc8] sm:$0xff]
    %v1700 = vld [vmem:[%s1673 + $0xd0] sm:$0xff]
    %v1701 = vld [vmem:[%s1673 + $0xd8] sm:$0xff]
    %v1702 = vld [vmem:[%s1673 + $0xe0] sm:$0xff]
    %v1703 = vld [vmem:[%s1673 + $0xe8] sm:$0xff]
    %v1704 = vld [vmem:[%s1673 + $0xf0] sm:$0xff]
    %v1705 = vld [vmem:[%s1673 + $0xf8] sm:$0xff]
    %s1706 = scalar_lea.vmem [#allocation5], 3
    %v1707 = vld [vmem:[%s1706] sm:$0x1]
    %v1709 = vperm.slane %v1707, 0
    %1711 = vmatpush.msra.mxu0 %v1689
    %1712 = vmatpush.msra.mxu0 %v1688
    %1713 = vmatpush.msra.mxu0 %v1687
    %1714 = vmatpush.msra.mxu0 %v1686
    %1715 = vmatpush.msra.mxu0 %v1685
    %1716 = vmatpush.msra.mxu0 %v1684
    %1717 = vmatpush.msra.mxu0 %v1683
    %1718 = vmatpush.msra.mxu0 %v1682
    %1719 = vmatpush.msra.mxu0 %v1681
    %1720 = vmatpush.msra.mxu0 %v1680
    %1721 = vmatpush.msra.mxu0 %v1679
    %1722 = vmatpush.msra.mxu0 %v1678
    %1723 = vmatpush.msra.mxu0 %v1677
    %1724 = vmatpush.msra.mxu0 %v1676
    %1725 = vmatpush.msra.mxu0 %v1675
    %1726 = vmatpush.msra.mxu0 %v1674
    %1727 = vmatmul.f32.gmra.mxu0 %v1641
    %v1728 = vpop.f32.mrf.mxu0
    %v1729 = vadd.f32 %v1709, %v1728
    %1730 = vmatmul.f32.gmra.mxu0 %v1643
    %v1731 = vpop.f32.mrf.mxu0
    %v1732 = vadd.f32 %v1709, %v1731
    %1733 = vmatmul.f32.gmra.mxu0 %v1645
    %v1734 = vpop.f32.mrf.mxu0
    %v1735 = vadd.f32 %v1709, %v1734
    %1736 = vmatmul.f32.gmra.mxu0 %v1647
    %v1737 = vpop.f32.mrf.mxu0
    %v1738 = vadd.f32 %v1709, %v1737
    %1739 = vmatmul.f32.gmra.mxu0 %v1649
    %v1740 = vpop.f32.mrf.mxu0
    %v1741 = vadd.f32 %v1709, %v1740
    %1742 = vmatmul.f32.gmra.mxu0 %v1651
    %v1743 = vpop.f32.mrf.mxu0
    %v1744 = vadd.f32 %v1709, %v1743
    %1745 = vmatmul.f32.gmra.mxu0 %v1653
    %v1746 = vpop.f32.mrf.mxu0
    %v1747 = vadd.f32 %v1709, %v1746
    %1748 = vmatmul.f32.gmra.mxu0 %v1655
    %v1749 = vpop.f32.mrf.mxu0
    %v1750 = vadd.f32 %v1709, %v1749
    %1751 = vmatmul.f32.gmra.mxu0 %v1657
    %v1752 = vpop.f32.mrf.mxu0
    %v1753 = vadd.f32 %v1709, %v1752
    %1754 = vmatmul.f32.gmra.mxu0 %v1659
    %v1755 = vpop.f32.mrf.mxu0
    %v1756 = vadd.f32 %v1709, %v1755
    %1757 = vmatmul.f32.gmra.mxu0 %v1661
    %v1758 = vpop.f32.mrf.mxu0
    %v1759 = vadd.f32 %v1709, %v1758
    %1760 = vmatmul.f32.gmra.mxu0 %v1663
    %v1761 = vpop.f32.mrf.mxu0
    %v1762 = vadd.f32 %v1709, %v1761
    %1763 = vmatmul.f32.gmra.mxu0 %v1665
    %v1764 = vpop.f32.mrf.mxu0
    %v1765 = vadd.f32 %v1709, %v1764
    %1766 = vmatmul.f32.gmra.mxu0 %v1667
    %v1767 = vpop.f32.mrf.mxu0
    %v1768 = vadd.f32 %v1709, %v1767
    %1769 = vmatmul.f32.gmra.mxu0 %v1669
    %v1770 = vpop.f32.mrf.mxu0
    %v1771 = vadd.f32 %v1709, %v1770
    %1772 = vmatmul.f32.gmra.mxu0 %v1671
    %v1773 = vpop.f32.mrf.mxu0
    %v1774 = vadd.f32 %v1709, %v1773
    %1775 = vdwg.mxu0
    %1776 = vmatpush.msra.mxu0 %v1705
    %1777 = vmatpush.msra.mxu0 %v1704
    %1778 = vmatpush.msra.mxu0 %v1703
    %1779 = vmatpush.msra.mxu0 %v1702
    %1780 = vmatpush.msra.mxu0 %v1701
    %1781 = vmatpush.msra.mxu0 %v1700
    %1782 = vmatpush.msra.mxu0 %v1699
    %1783 = vmatpush.msra.mxu0 %v1698
    %1784 = vmatpush.msra.mxu0 %v1697
    %1785 = vmatpush.msra.mxu0 %v1696
    %1786 = vmatpush.msra.mxu0 %v1695
    %1787 = vmatpush.msra.mxu0 %v1694
    %1788 = vmatpush.msra.mxu0 %v1693
    %1789 = vmatpush.msra.mxu0 %v1692
    %1790 = vmatpush.msra.mxu0 %v1691
    %1791 = vmatpush.msra.mxu0 %v1690
    %1792 = vmatmul.f32.gmra.mxu0 %v1642
    %v1793 = vpop.f32.mrf.mxu0
    %v1794 = vadd.f32 %v1729, %v1793
    %1795 = vmatmul.f32.gmra.mxu0 %v1644
    %v1796 = vpop.f32.mrf.mxu0
    %v1797 = vadd.f32 %v1732, %v1796
    %1798 = vmatmul.f32.gmra.mxu0 %v1646
    %v1799 = vpop.f32.mrf.mxu0
    %v1800 = vadd.f32 %v1735, %v1799
    %1801 = vmatmul.f32.gmra.mxu0 %v1648
    %v1802 = vpop.f32.mrf.mxu0
    %v1803 = vadd.f32 %v1738, %v1802
    %1804 = vmatmul.f32.gmra.mxu0 %v1650
    %v1805 = vpop.f32.mrf.mxu0
    %v1806 = vadd.f32 %v1741, %v1805
    %1807 = vmatmul.f32.gmra.mxu0 %v1652
    %v1808 = vpop.f32.mrf.mxu0
    %v1809 = vadd.f32 %v1744, %v1808
    %1810 = vmatmul.f32.gmra.mxu0 %v1654
    %v1811 = vpop.f32.mrf.mxu0
    %v1812 = vadd.f32 %v1747, %v1811
    %1813 = vmatmul.f32.gmra.mxu0 %v1656
    %v1814 = vpop.f32.mrf.mxu0
    %v1815 = vadd.f32 %v1750, %v1814
    %1816 = vmatmul.f32.gmra.mxu0 %v1658
    %v1817 = vpop.f32.mrf.mxu0
    %v1818 = vadd.f32 %v1753, %v1817
    %1819 = vmatmul.f32.gmra.mxu0 %v1660
    %v1820 = vpop.f32.mrf.mxu0
    %v1821 = vadd.f32 %v1756, %v1820
    %1822 = vmatmul.f32.gmra.mxu0 %v1662
    %v1823 = vpop.f32.mrf.mxu0
    %v1824 = vadd.f32 %v1759, %v1823
    %1825 = vmatmul.f32.gmra.mxu0 %v1664
    %v1826 = vpop.f32.mrf.mxu0
    %v1827 = vadd.f32 %v1762, %v1826
    %1828 = vmatmul.f32.gmra.mxu0 %v1666
    %v1829 = vpop.f32.mrf.mxu0
    %v1830 = vadd.f32 %v1765, %v1829
    %1831 = vmatmul.f32.gmra.mxu0 %v1668
    %v1832 = vpop.f32.mrf.mxu0
    %v1833 = vadd.f32 %v1768, %v1832
    %1834 = vmatmul.f32.gmra.mxu0 %v1670
    %v1835 = vpop.f32.mrf.mxu0
    %v1836 = vadd.f32 %v1771, %v1835
    %1837 = vmatmul.f32.gmra.mxu0 %v1672
    %v1838 = vpop.f32.mrf.mxu0
    %v1839 = vadd.f32 %v1774, %v1838
    %1840 = vdwg.mxu0
    %v1841 = vmax.f32 %v1794, 0.0
    %v1842 = vmax.f32 %v1797, 0.0
    %v1843 = vmax.f32 %v1800, 0.0
    %v1844 = vmax.f32 %v1803, 0.0
    %v1845 = vmax.f32 %v1806, 0.0
    %v1846 = vmax.f32 %v1809, 0.0
    %v1847 = vmax.f32 %v1812, 0.0
    %v1848 = vmax.f32 %v1815, 0.0
    %v1849 = vmax.f32 %v1818, 0.0
    %v1850 = vmax.f32 %v1821, 0.0
    %v1851 = vmax.f32 %v1824, 0.0
    %v1852 = vmax.f32 %v1827, 0.0
    %v1853 = vmax.f32 %v1830, 0.0
    %v1854 = vmax.f32 %v1833, 0.0
    %v1855 = vmax.f32 %v1836, 0.0
    %v1856 = vmax.f32 %v1839, 0.0
    %1857 = vst [vmem:[#allocation2 + $0x8] sm:$0xff] %v1841
    %1858 = vst [vmem:[#allocation2 + $0x18] sm:$0xff] %v1842
    %1859 = vst [vmem:[#allocation2 + $0x28] sm:$0xff] %v1843
    %1860 = vst [vmem:[#allocation2 + $0x38] sm:$0xff] %v1844
    %1861 = vst [vmem:[#allocation2 + $0x48] sm:$0xff] %v1845
    %1862 = vst [vmem:[#allocation2 + $0x58] sm:$0xff] %v1846
    %1863 = vst [vmem:[#allocation2 + $0x68] sm:$0xff] %v1847
    %1864 = vst [vmem:[#allocation2 + $0x78] sm:$0xff] %v1848
    %1865 = vst [vmem:[#allocation2 + $0x88] sm:$0xff] %v1849
    %1866 = vst [vmem:[#allocation2 + $0x98] sm:$0xff] %v1850
    %1867 = vst [vmem:[#allocation2 + $0xa8] sm:$0xff] %v1851
    %1868 = vst [vmem:[#allocation2 + $0xb8] sm:$0xff] %v1852
    %1869 = vst [vmem:[#allocation2 + $0xc8] sm:$0xff] %v1853
    %1870 = vst [vmem:[#allocation2 + $0xd8] sm:$0xff] %v1854
    %1871 = vst [vmem:[#allocation2 + $0xe8] sm:$0xff] %v1855
    %1872 = vst [vmem:[#allocation2 + $0xf8] sm:$0xff] %v1856
    %v1873 = vld [vmem:[#allocation2 + $0x8] sm:$0xff]
    %v1874 = vld [vmem:[#allocation2 + $0x18] sm:$0xff]
    %v1875 = vld [vmem:[#allocation2 + $0x28] sm:$0xff]
    %v1876 = vld [vmem:[#allocation2 + $0x38] sm:$0xff]
    %v1877 = vld [vmem:[#allocation2 + $0x48] sm:$0xff]
    %v1878 = vld [vmem:[#allocation2 + $0x58] sm:$0xff]
    %v1879 = vld [vmem:[#allocation2 + $0x68] sm:$0xff]
    %v1880 = vld [vmem:[#allocation2 + $0x78] sm:$0xff]
    %v1881 = vld [vmem:[#allocation2 + $0x88] sm:$0xff]
    %v1882 = vld [vmem:[#allocation2 + $0x98] sm:$0xff]
    %v1883 = vld [vmem:[#allocation2 + $0xa8] sm:$0xff]
    %v1884 = vld [vmem:[#allocation2 + $0xb8] sm:$0xff]
    %v1885 = vld [vmem:[#allocation2 + $0xc8] sm:$0xff]
    %v1886 = vld [vmem:[#allocation2 + $0xd8] sm:$0xff]
    %v1887 = vld [vmem:[#allocation2 + $0xe8] sm:$0xff]
    %v1888 = vld [vmem:[#allocation2 + $0xf8] sm:$0xff]
    %1889 = vst [vmem:[#allocation8] sm:$0xff] %v1873
    %1890 = vst [vmem:[#allocation8 + $0x8] sm:$0xff] %v1874
    %1891 = vst [vmem:[#allocation8 + $0x10] sm:$0xff] %v1875
    %1892 = vst [vmem:[#allocation8 + $0x18] sm:$0xff] %v1876
    %1893 = vst [vmem:[#allocation8 + $0x20] sm:$0xff] %v1877
    %1894 = vst [vmem:[#allocation8 + $0x28] sm:$0xff] %v1878
    %1895 = vst [vmem:[#allocation8 + $0x30] sm:$0xff] %v1879
    %1896 = vst [vmem:[#allocation8 + $0x38] sm:$0xff] %v1880
    %1897 = vst [vmem:[#allocation8 + $0x40] sm:$0xff] %v1881
    %1898 = vst [vmem:[#allocation8 + $0x48] sm:$0xff] %v1882
    %1899 = vst [vmem:[#allocation8 + $0x50] sm:$0xff] %v1883
    %1900 = vst [vmem:[#allocation8 + $0x58] sm:$0xff] %v1884
    %1901 = vst [vmem:[#allocation8 + $0x60] sm:$0xff] %v1885
    %1902 = vst [vmem:[#allocation8 + $0x68] sm:$0xff] %v1886
    %1903 = vst [vmem:[#allocation8 + $0x70] sm:$0xff] %v1887
    %1904 = vst [vmem:[#allocation8 + $0x78] sm:$0xff] %v1888
    // Predicated region
    $region30: #{tpu_custom_call.1} parent=1 // pred_check
      _
    $region31: #{tpu_custom_call.1} parent=1 // pred_check_branch
      %1906 = sbr.rel (0) target = $region33
    $region32: #{tpu_custom_call.1} parent=1 // pred_region
      %1908 = vsyncadd [#allocation7], 0
      %s1909 = sshll.u32 [#allocation8], 4
      %s1910 = int_to_ptr.vmem [resolvable:$true] %s1909
      %s1911 = sshll.u32 %s6, 4
      %s1912 = int_to_ptr.hbm [resolvable:$true] %s1911
      %1917 = dma.vmem_to_hbm [thread:$0]  %s1910, 2048, %s1912, [#allocation7], 128, 128, 8
    $region33: #{tpu_custom_call.1} parent=1 // pred_fallthru
      _
    // Predicated region
    $region34: #{tpu_custom_call.1} parent=1 // pred_check
      _
    $region35: #{tpu_custom_call.1} parent=1 // pred_check_branch
      %1919 = sbr.rel (0) target = $region37
    $region36: #{tpu_custom_call.1} parent=1 // pred_region
      %1921 = dma.done [#allocation7], 2048
    $region37: #{tpu_custom_call.1} parent=1 // pred_fallthru
      _
    %1922 = vsyncpa [#allocation6], 1
    %1923 = vsyncpa [#allocation7], 1
  %1924 = vsyncmov [#allocation4]
  %s1925 = vpop.sfrf %1924
  %p1926 = scmp.eq.s32.totalorder %s1925, 0
  %p1927 = pneg %p1926
  %1929 = shalt.err (%p1927)

</llo_original>
